<compile_context>
chip_gen: v7x
topology: tpu7x:2x2x1
jax: 0.10.0
libtpu: 0.0.40
codegen_flags: <defaults>
</compile_context>

<pallas_src>
import math

import jax
import jax.numpy as jnp
from jax import lax
from jax.experimental import pallas as pl
from jax.experimental.pallas import tpu as pltpu


def _round_up(a, m):
    return (a + m - 1) // m * m


# ---------------------------------------------------------------------------
# Pallas kernels
# ---------------------------------------------------------------------------
def _make_conv_kernel(K, Wpp, tile_L, use_bn):
    """Fused conv (+bias) kernel: K aligned sublane slices -> lane-folded
    operand -> one MXU matmul (f32 acc) -> fused epilogue (ReLU or masked BN
    moments).  Output is produced channels-first [Cout_pad, tile_L]."""

    def conv_kernel(*refs):
        if use_bn:
            x_ref, w_ref, b_ref, m_ref, y_ref, mom_ref = refs
        else:
            x_ref, w_ref, b_ref, y_ref = refs

        # K shifted tap windows; starts kh*Wpp are 8-aligned (Wpp % 8 == 0) and
        # the kw taps are already interleaved along lanes by the wrapper.
        pieces = [x_ref[0, 0, kh * Wpp: kh * Wpp + tile_L, :] for kh in range(K)]
        xmat = pieces[0] if K == 1 else jnp.concatenate(pieces, axis=-1)

        # w_ref is [Cout_pad, K*K*Cin]; contract the last dim of both operands
        # so the accumulator comes out channels-first -> no in-kernel transpose.
        acc = lax.dot_general(w_ref[...], xmat, (((1,), (1,)), ((), ())),
                              preferred_element_type=jnp.float32)  # [Cout_pad, tile_L]
        y = acc + b_ref[...]                                       # bias [Cout_pad, 1]

        if use_bn:
            # Round to the bf16 values the normalization pass will actually see,
            # so the batch statistics describe exactly what gets normalized.
            y = y.astype(jnp.bfloat16).astype(jnp.float32)
            # Bias-centred, masked moments (mask kills wrap columns + pad rows).
            yc = (y - b_ref[...]) * m_ref[...]                     # mask [1, tile_L]
            s = jnp.sum(yc, axis=1, keepdims=True)                 # [Cout_pad, 1]
            ss = jnp.sum(yc * yc, axis=1, keepdims=True)
            mom_ref[0, 0] = jnp.concatenate(
                [s, ss, jnp.zeros((s.shape[0], 6), jnp.float32)], axis=1)
            y_ref[0] = y.astype(y_ref.dtype)                       # bf16 pre-BN
        else:
            y_ref[0] = jnp.maximum(y, 0.0).astype(y_ref.dtype)     # fused ReLU

    return conv_kernel


def _bn_relu_kernel(y_ref, scale_ref, shift_ref, o_ref):
    """Fused BatchNorm (precomputed per-channel scale/shift) + ReLU on a
    channels-first [Cout_pad, tile_L] block (lane-dense stores)."""
    y = y_ref[0].astype(jnp.float32)
    o_ref[0] = jnp.maximum(y * scale_ref[...] + shift_ref[...], 0.0
                           ).astype(o_ref.dtype)


# ---------------------------------------------------------------------------
# ConvBlock forward
# ---------------------------------------------------------------------------
def conv_block_forward(params, x, *, stride=1, padding=1, eps=1e-5,
                       target_tile_rows=512, vmem_budget=12 << 20):
    """PyTorch ConvBlock.forward: Conv2d(k, s, p) -> [BatchNorm2d] -> ReLU.

    x: [B, Cin, H, W] float32 (NCHW).  Returns [B, Cout, Ho, Wo] float32.
    """
    w = params["weight"]            # [Cout, Cin, K, K] (PyTorch OIHW layout)
    bias = params["bias"]           # [Cout]
    use_bn = params["use_bn"]
    Cout, Cin, K, K2 = w.shape
    assert K == K2
    if stride != 1:
        # TODO(synk): strided conv (the source model only uses stride=1 ConvBlocks).
        raise NotImplementedError("stride != 1 not supported")

    B, _, H, W = x.shape
    Hp, Wp = H + 2 * padding, W + 2 * padding
    Ho, Wo = Hp - K + 1, Wp - K + 1
    Wpp = _round_up(Wp, 8)              # 8-aligned row pitch -> aligned tap slices
    Ckw = K * Cin                       # kw-interleaved lane width
    CK = K * Ckw                        # folded contraction dim
    Cout_pad = _round_up(Cout, 128)     # lane-/MXU-friendly channel padding

    # --- row-tile size: tile_h image rows, tile_L = tile_h*Wpp extended rows,
    #     tile_L a multiple of 128 (lane-dense output blocks), VMEM-bounded.
    step = 128 // math.gcd(Wpp, 128)
    tile_h = step * max(1, target_tile_rows // (step * Wpp))
    tile_h = min(tile_h, _round_up(Ho, step))

    def _vmem_est(th):
        tl, wr = th * Wpp, (th + K - 1) * Wpp
        return (2 * wr * Ckw * 2                      # double-buffered input window (bf16)
                + CK * Cout_pad * 2                   # folded weight (bf16)
                + tl * CK * 2                         # folded operand
                + 2 * tl * Cout_pad * 4               # f32 accumulator + temps
                + 2 * Cout_pad * tl * (2 if use_bn else 4)   # double-buffered output
                + (2 * Cout_pad * 8 * 4 if use_bn else 0))   # moments

    while tile_h > step and _vmem_est(tile_h) > vmem_budget:
        tile_h -= step

    tile_L = tile_h * Wpp
    Ho_pad = _round_up(Ho, tile_h)
    n_tiles = Ho_pad // tile_h
    L_pad, L_real = Ho_pad * Wpp, Ho * Wpp
    Hp_pad = Ho_pad + K - 1
    W_rows = (tile_h + K - 1) * Wpp
    vmem_limit = int(min(max(32 << 20, 2 * _vmem_est(tile_h)), 48 << 20))

    # --- wrapper-side layout: NHWC, spatial pad (to Wpp / Hp_pad), flatten,
    #     kw interleave, halo windows (duplication (K-1)/tile_h when n_tiles>1).
    xp = jnp.pad(jnp.transpose(x, (0, 2, 3, 1)),
                 ((0, 0), (padding, padding + (Hp_pad - Hp)),
                  (padding, padding + (Wpp - Wp)), (0, 0)))
    R = Hp_pad * Wpp
    flat = jnp.pad(xp.reshape(B, R, Cin), ((0, 0), (0, K - 1), (0, 0)))
    xr = jnp.stack([flat[:, kw:kw + R, :] for kw in range(K)], axis=2
                   ).reshape(B, R, Ckw).astype(jnp.bfloat16)
    if n_tiles == 1:
        xw = xr[:, None, :W_rows, :]
    else:
        xw = jnp.stack([xr[:, j * tile_L: j * tile_L + W_rows, :]
                        for j in range(n_tiles)], axis=1)

    # [Cout, Cin, kh, kw] -> [Cout_pad, (kh, kw, cin)]  (matches in-kernel fold order)
    w_f = jnp.pad(jnp.transpose(w, (0, 2, 3, 1)).reshape(Cout, CK),
                  ((0, Cout_pad - Cout), (0, 0))).astype(jnp.bfloat16)
    b_pad = jnp.pad(bias.astype(jnp.float32), (0, Cout_pad - Cout))
    b_f = b_pad.reshape(Cout_pad, 1)

    inputs = [xw, w_f, b_f]
    in_specs = [pl.BlockSpec((1, 1, W_rows, Ckw), lambda b, j: (b, j, 0, 0)),
                pl.BlockSpec((Cout_pad, CK), lambda b, j: (0, 0)),
                pl.BlockSpec((Cout_pad, 1), lambda b, j: (0, 0))]
    out_shapes = [jax.ShapeDtypeStruct((B, Cout_pad, L_pad),
                                       jnp.bfloat16 if use_bn else jnp.float32)]
    out_specs = [pl.BlockSpec((1, Cout_pad, tile_L), lambda b, j: (b, 0, j))]
    if use_bn:
        # Tiny valid-sample mask over the extended rows (wrap cols + pad rows).
        rows = jnp.arange(L_pad, dtype=jnp.int32)
        mask = (((rows % Wpp) < Wo) & (rows < L_real)
                ).astype(jnp.float32).reshape(1, L_pad)
        inputs.append(mask)
        in_specs.append(pl.BlockSpec((1, tile_L), lambda b, j: (0, j)))
        out_shapes.append(jax.ShapeDtypeStruct((B, n_tiles, Cout_pad, 8),
                                               jnp.float32))
        out_specs.append(pl.BlockSpec((1, 1, Cout_pad, 8),
                                      lambda b, j: (b, j, 0, 0)))

    cost = pl.CostEstimate(
        flops=2 * B * n_tiles * Cout_pad * tile_L * CK,
        transcendentals=0,
        bytes_accessed=int(xw.size * 2 + w_f.size * 2
                           + B * Cout_pad * L_pad * (2 if use_bn else 4)))

    res = pl.pallas_call(
        _make_conv_kernel(K, Wpp, tile_L, use_bn),
        out_shape=tuple(out_shapes),
        grid=(B, n_tiles),
        in_specs=in_specs,
        out_specs=tuple(out_specs),
        compiler_params=pltpu.CompilerParams(
            dimension_semantics=("parallel", "parallel"),
            vmem_limit_bytes=vmem_limit),
        cost_estimate=cost,
    )(*inputs)

    if use_bn:
        y_pre, mom = res
        # Finalize BatchNorm batch statistics (tiny [Cout_pad] reduce in JAX).
        n = float(B * Ho * Wo)
        s = jnp.sum(mom[..., 0], axis=(0, 1)) / n          # E[y - bias]
        ss = jnp.sum(mom[..., 1], axis=(0, 1)) / n         # E[(y - bias)^2]
        var = jnp.maximum(ss - s * s, 0.0)
        mean = s + b_pad
        gamma = jnp.pad(params["gamma"].astype(jnp.float32), (0, Cout_pad - Cout))
        beta = jnp.pad(params["beta"].astype(jnp.float32), (0, Cout_pad - Cout))
        scale = gamma * lax.rsqrt(var + eps)
        shift = beta - mean * scale
        y_out = pl.pallas_call(
            _bn_relu_kernel,
            out_shape=jax.ShapeDtypeStruct((B, Cout_pad, L_pad), jnp.float32),
            grid=(B, n_tiles),
            in_specs=[pl.BlockSpec((1, Cout_pad, tile_L), lambda b, j: (b, 0, j)),
                      pl.BlockSpec((Cout_pad, 1), lambda b, j: (0, 0)),
                      pl.BlockSpec((Cout_pad, 1), lambda b, j: (0, 0))],
            out_specs=pl.BlockSpec((1, Cout_pad, tile_L), lambda b, j: (b, 0, j)),
            compiler_params=pltpu.CompilerParams(
                dimension_semantics=("parallel", "parallel"),
                vmem_limit_bytes=vmem_limit),
        )(y_pre, scale.reshape(Cout_pad, 1), shift.reshape(Cout_pad, 1))
    else:
        y_out = res[0]

    # Already channels-first: just drop channel / column / row padding (no
    # XLA transpose needed).
    return y_out.reshape(B, Cout_pad, Ho_pad, Wpp)[:, :Cout, :Ho, :Wo]


# ---------------------------------------------------------------------------
# Pure-JAX reference (numerical sanity checking only)
# ---------------------------------------------------------------------------
def conv_block_reference(params, x, *, stride=1, padding=1, eps=1e-5):
    y = lax.conv_general_dilated(
        x, params["weight"], window_strides=(stride, stride),
        padding=[(padding, padding), (padding, padding)],
        dimension_numbers=("NCHW", "OIHW", "NCHW"))
    y = y + params["bias"].reshape(1, -1, 1, 1)
    if params["use_bn"]:
        mean = jnp.mean(y, axis=(0, 2, 3), keepdims=True)
        var = jnp.mean(jnp.square(y - mean), axis=(0, 2, 3), keepdims=True)
        y = (y - mean) * lax.rsqrt(var + eps)
        y = (y * params["gamma"].reshape(1, -1, 1, 1)
             + params["beta"].reshape(1, -1, 1, 1))
    return jnp.maximum(y, 0.0)


# ---------------------------------------------------------------------------
if __name__ == "__main__":
    import numpy as np

    key = jax.random.PRNGKey(0)
    keys = jax.random.split(key, 13)

    # Case 1: single row-tile, both BN and no-BN paths.
    B, Cin, H, W, Cout, K = 2, 4, 16, 16, 32, 3
    x = jax.random.normal(keys[0], (B, Cin, H, W), jnp.float32)
    params_bn = {
        "weight": jax.random.normal(keys[1], (Cout, Cin, K, K), jnp.float32)
                  / math.sqrt(K * K * Cin),
        "bias": 0.1 * jax.random.normal(keys[2], (Cout,), jnp.float32),
        "gamma": 1.0 + 0.1 * jax.random.normal(keys[3], (Cout,), jnp.float32),
        "beta": 0.1 * jax.random.normal(keys[4], (Cout,), jnp.float32),
        "use_bn": True,
    }
    params_nobn = {
        "weight": jax.random.normal(keys[5], (Cout, Cin, K, K), jnp.float32)
                  / math.sqrt(K * K * Cin),
        "bias": 0.1 * jax.random.normal(keys[6], (Cout,), jnp.float32),
        "use_bn": False,
    }
    out_bn = conv_block_forward(params_bn, x, stride=1, padding=1)
    out_nobn = conv_block_forward(params_nobn, x, stride=1, padding=1)

    # Case 2: multi row-tile path (Ho > tile_h) with padded tail rows and
    # Cout not a multiple of 8 (exercises channel padding).
    B2, Cin2, H2, W2, Cout2 = 1, 3, 20, 20, 10
    x2 = jax.random.normal(keys[7], (B2, Cin2, H2, W2), jnp.float32)
    params2 = {
        "weight": jax.random.normal(keys[8], (Cout2, Cin2, K, K), jnp.float32)
                  / math.sqrt(K * K * Cin2),
        "bias": 0.1 * jax.random.normal(keys[9], (Cout2,), jnp.float32),
        "gamma": 1.0 + 0.1 * jax.random.normal(keys[10], (Cout2,), jnp.float32),
        "beta": 0.1 * jax.random.normal(keys[11], (Cout2,), jnp.float32),
        "use_bn": True,
    }
    out2 = conv_block_forward(params2, x2, stride=1, padding=1)

    jax.block_until_ready((out_bn, out_nobn, out2))
    assert out_bn.shape == (B, Cout, H, W)
    assert out_nobn.shape == (B, Cout, H, W)
    assert out2.shape == (B2, Cout2, H2, W2)

    # Numerical sanity vs pure-JAX reference (bf16 matmul operands in the
    # kernel -> loose tolerance; accumulation and statistics are f32).
    np.testing.assert_allclose(
        np.asarray(out_nobn),
        np.asarray(conv_block_reference(params_nobn, x, stride=1, padding=1)),
        atol=5e-2, rtol=5e-2)
    np.testing.assert_allclose(
        np.asarray(out_bn),
        np.asarray(conv_block_reference(params_bn, x, stride=1, padding=1)),
        atol=5e-2, rtol=5e-2)
    np.testing.assert_allclose(
        np.asarray(out2),
        np.asarray(conv_block_reference(params2, x2, stride=1, padding=1)),
        atol=5e-2, rtol=5e-2)

    print("KERNEL_OK")
</pallas_src>

<mosaic_0001>
module attributes {stable_mosaic.version = 11 : i64} {
  func.func @conv_kernel(%arg0: i32, %arg1: i32, %arg2: memref<1x1x432x12xbf16, #tpu.memory_space<vmem>>, %arg3: memref<128x36xbf16, #tpu.memory_space<vmem>>, %arg4: memref<128x1xf32, #tpu.memory_space<vmem>>, %arg5: memref<1x384xf32, #tpu.memory_space<vmem>>, %arg6: memref<1x128x384xbf16, #tpu.memory_space<vmem>>, %arg7: memref<1x1x128x8xf32, #tpu.memory_space<vmem>>) attributes {dimension_semantics = [#tpu.dimension_semantics<parallel>, #tpu.dimension_semantics<parallel>], iteration_bounds = array<i64: 2, 1>, scalar_prefetch = 0 : i64, scratch_operands = 0 : i64, tpu.core_type = #tpu.core_type<tc>, window_params = [{transform_indices = @transform_0, window_bounds = array<i64: 1, 1, 432, 12>}, {pipeline_mode = #tpu.pipeline_mode<synchronous>, transform_indices = @transform_1, window_bounds = array<i64: 128, 36>}, {pipeline_mode = #tpu.pipeline_mode<synchronous>, transform_indices = @transform_2, window_bounds = array<i64: 128, 1>}, {transform_indices = @transform_3, window_bounds = array<i64: 1, 384>}, {transform_indices = @transform_4, window_bounds = array<i64: 1, 128, 384>}, {transform_indices = @transform_5, window_bounds = array<i64: 1, 1, 128, 8>}]} {
    %c0 = arith.constant 0 : index
    %c0_0 = arith.constant 0 : index
    %c0_1 = arith.constant 0 : index
    %c0_2 = arith.constant 0 : index
    %0 = vector.load %arg2[%c0, %c0_0, %c0_1, %c0_2] : memref<1x1x432x12xbf16, #tpu.memory_space<vmem>>, vector<1x1x384x12xbf16>
    %1 = vector.shape_cast %0 : vector<1x1x384x12xbf16> to vector<384x12xbf16>
    %c0_3 = arith.constant 0 : index
    %c0_4 = arith.constant 0 : index
    %c24 = arith.constant 24 : index
    %c0_5 = arith.constant 0 : index
    %2 = vector.load %arg2[%c0_3, %c0_4, %c24, %c0_5] : memref<1x1x432x12xbf16, #tpu.memory_space<vmem>>, vector<1x1x384x12xbf16>
    %3 = vector.shape_cast %2 : vector<1x1x384x12xbf16> to vector<384x12xbf16>
    %c0_6 = arith.constant 0 : index
    %c0_7 = arith.constant 0 : index
    %c48 = arith.constant 48 : index
    %c0_8 = arith.constant 0 : index
    %4 = vector.load %arg2[%c0_6, %c0_7, %c48, %c0_8] : memref<1x1x432x12xbf16, #tpu.memory_space<vmem>>, vector<1x1x384x12xbf16>
    %5 = vector.shape_cast %4 : vector<1x1x384x12xbf16> to vector<384x12xbf16>
    %6 = tpu.concatenate %1, %3, %5 in 1 : vector<384x12xbf16>, vector<384x12xbf16>, vector<384x12xbf16> -> vector<384x36xbf16>
    %c0_9 = arith.constant 0 : index
    %c0_10 = arith.constant 0 : index
    %7 = vector.load %arg3[%c0_9, %c0_10] : memref<128x36xbf16, #tpu.memory_space<vmem>>, vector<128x36xbf16>
    %cst = arith.constant dense<0.000000e+00> : vector<128x384xf32>
    %8 = tpu.matmul %7, %6, %cst {dimension_numbers = #tpu.dot_dimension_numbers<[1], [1], [0], [0], [0, 0, 1, 0], [], []>} : vector<128x36xbf16>, vector<384x36xbf16>, vector<128x384xf32> -> vector<128x384xf32>
    %c0_11 = arith.constant 0 : index
    %c0_12 = arith.constant 0 : index
    %9 = vector.load %arg4[%c0_11, %c0_12] : memref<128x1xf32, #tpu.memory_space<vmem>>, vector<128x1xf32>
    %10 = vector.broadcast %9 : vector<128x1xf32> to vector<128x384xf32>
    %11 = arith.addf %8, %10 : vector<128x384xf32>
    %12 = arith.truncf %11 : vector<128x384xf32> to vector<128x384xbf16>
    %13 = arith.extf %12 : vector<128x384xbf16> to vector<128x384xf32>
    %c0_13 = arith.constant 0 : index
    %c0_14 = arith.constant 0 : index
    %14 = vector.load %arg4[%c0_13, %c0_14] : memref<128x1xf32, #tpu.memory_space<vmem>>, vector<128x1xf32>
    %15 = vector.broadcast %14 : vector<128x1xf32> to vector<128x384xf32>
    %16 = arith.subf %13, %15 : vector<128x384xf32>
    %c0_15 = arith.constant 0 : index
    %c0_16 = arith.constant 0 : index
    %17 = vector.load %arg5[%c0_15, %c0_16] : memref<1x384xf32, #tpu.memory_space<vmem>>, vector<1x384xf32>
    %18 = vector.broadcast %17 : vector<1x384xf32> to vector<128x384xf32>
    %19 = arith.mulf %16, %18 : vector<128x384xf32>
    %cst_17 = arith.constant dense<0.000000e+00> : vector<128xf32>
    %20 = vector.multi_reduction <add>, %19, %cst_17 [1] : vector<128x384xf32> to vector<128xf32>
    %21 = vector.shape_cast %20 : vector<128xf32> to vector<128x1xf32>
    %22 = arith.mulf %19, %19 : vector<128x384xf32>
    %cst_18 = arith.constant dense<0.000000e+00> : vector<128xf32>
    %23 = vector.multi_reduction <add>, %22, %cst_18 [1] : vector<128x384xf32> to vector<128xf32>
    %24 = vector.shape_cast %23 : vector<128xf32> to vector<128x1xf32>
    %cst_19 = arith.constant 0.000000e+00 : f32
    %25 = vector.broadcast %cst_19 : f32 to vector<128x6xf32>
    %26 = tpu.concatenate %21, %24, %25 in 1 : vector<128x1xf32>, vector<128x1xf32>, vector<128x6xf32> -> vector<128x8xf32>
    %c0_20 = arith.constant 0 : index
    %c0_21 = arith.constant 0 : index
    %c0_22 = arith.constant 0 : index
    %c0_23 = arith.constant 0 : index
    %27 = vector.load %arg7[%c0_20, %c0_21, %c0_22, %c0_23] : memref<1x1x128x8xf32, #tpu.memory_space<vmem>>, vector<1x1x128x8xf32>
    %28 = vector.shape_cast %27 : vector<1x1x128x8xf32> to vector<128x8xf32>
    %29 = vector.shape_cast %26 : vector<128x8xf32> to vector<1x1x128x8xf32>
    tpu.vector_store %arg7[%c0_20, %c0_21, %c0_22, %c0_23], %29 {strides = array<i32>} : memref<1x1x128x8xf32, #tpu.memory_space<vmem>>, vector<1x1x128x8xf32>,
    %30 = arith.truncf %13 : vector<128x384xf32> to vector<128x384xbf16>
    %c0_24 = arith.constant 0 : index
    %c0_25 = arith.constant 0 : index
    %c0_26 = arith.constant 0 : index
    %31 = vector.load %arg6[%c0_24, %c0_25, %c0_26] : memref<1x128x384xbf16, #tpu.memory_space<vmem>>, vector<1x128x384xbf16>
    %32 = vector.shape_cast %31 : vector<1x128x384xbf16> to vector<128x384xbf16>
    %33 = vector.shape_cast %30 : vector<128x384xbf16> to vector<1x128x384xbf16>
    tpu.vector_store %arg6[%c0_24, %c0_25, %c0_26], %33 {strides = array<i32>} : memref<1x128x384xbf16, #tpu.memory_space<vmem>>, vector<1x128x384xbf16>,
    return
  }
  func.func @transform_0(%arg0: i32, %arg1: i32) -> (i32, i32, i32, i32) {
    %c0_i32 = arith.constant 0 : i32
    %c0_i32_0 = arith.constant 0 : i32
    %c0_i32_1 = arith.constant 0 : i32
    return %arg0, %arg1, %c0_i32, %c0_i32_0 : i32, i32, i32, i32
  }
  func.func @transform_1(%arg0: i32, %arg1: i32) -> (i32, i32) {
    %c0_i32 = arith.constant 0 : i32
    %c0_i32_0 = arith.constant 0 : i32
    %c0_i32_1 = arith.constant 0 : i32
    return %c0_i32, %c0_i32_0 : i32, i32
  }
  func.func @transform_2(%arg0: i32, %arg1: i32) -> (i32, i32) {
    %c0_i32 = arith.constant 0 : i32
    %c0_i32_0 = arith.constant 0 : i32
    %c0_i32_1 = arith.constant 0 : i32
    return %c0_i32, %c0_i32_0 : i32, i32
  }
  func.func @transform_3(%arg0: i32, %arg1: i32) -> (i32, i32) {
    %c0_i32 = arith.constant 0 : i32
    %c0_i32_0 = arith.constant 0 : i32
    return %c0_i32, %arg1 : i32, i32
  }
  func.func @transform_4(%arg0: i32, %arg1: i32) -> (i32, i32, i32) {
    %c0_i32 = arith.constant 0 : i32
    %c0_i32_0 = arith.constant 0 : i32
    return %arg0, %c0_i32, %arg1 : i32, i32, i32
  }
  func.func @transform_5(%arg0: i32, %arg1: i32) -> (i32, i32, i32, i32) {
    %c0_i32 = arith.constant 0 : i32
    %c0_i32_0 = arith.constant 0 : i32
    %c0_i32_1 = arith.constant 0 : i32
    return %arg0, %arg1, %c0_i32, %c0_i32_0 : i32, i32, i32, i32
  }
}

</mosaic_0001>

<llo_original>
// kernel: tpu_custom_call.1
$region0: #{tpu_custom_call.1}
  #allocation0 [shape = 'u32[]', space=smem, size = 0x4, offset = 0x4, fixed_abs, tag = 'smem constant byte address 0x4 - core index']
  #allocation1 [shape = 'u32[144,128]{1,0:T(1,128)}', space=vmem, size = 0x12000, scoped, tag = 'internal scratch']
  %s0 = inlined_call_operand.vmem [shape: bf16[2,1,432,12], index: 0, kind: input, shape index: {}]
  %s1 = inlined_call_operand.vmem [shape: bf16[128,36], index: 1, kind: input, shape index: {}]
  %s2 = inlined_call_operand.vmem [shape: f32[128,1], index: 2, kind: input, shape index: {}]
  %s3 = inlined_call_operand.vmem [shape: f32[1,384], index: 3, kind: input, shape index: {}]
  %s4 = inlined_call_operand.hbm [shape: bf16[2,128,384], index: 4, kind: output, shape index: {0}]
  %s5 = inlined_call_operand.vmem [shape: f32[2,1,128,8], index: 5, kind: output, shape index: {1}]
  %6 = xla_tuple %s4, %s5
  %s7 = sld [smem:[#allocation0]]
  $region57: #{tpu_custom_call.1} parent=0
    _
  %s9 = ssub.s32 1, %s7
  %s10 = scalar_select 0, %s9, %s7
  $region1: #{tpu_custom_call.1} parent=0
    #allocation2 [shape = 'u8[196608]{0}', space=vmem, size = 0x30000, scoped, tag = 'output window, operand 0']
    #allocation3 [shape = 's32[2]{0}', space=sflag, size = 0x8, scoped, tag = 'scoped memory for tpu_custom_call.1']
    %11 = vsyncpa [#allocation3], 0
    %s12 = scalar_lea.sflag [#allocation3], 1
    %13 = vsyncpa %s12, 0
    loop: start=0, step=1, limit=4
    $region2: #{tpu_custom_call.1} parent=1 // loop_pre_header
      _
    $region3: #{tpu_custom_call.1} parent=1 // loop_header
      %s15 = sphi 0, %s19
      %p16 = scmp.ge.s32.totalorder %s15, 4
      %s22 = sphi 0, %s34
      %s23 = sphi 0, %s30
      %s24 = sphi 0, %s22
      %s25 = sphi 0, %s23
      %s26 = sphi 0, %s24
      %s27 = sphi 0, %s25
      %s39 = sphi 0, %s41
      %s42 = sphi 0, %s39
      %s43 = sphi 0, %s42
      %s59 = sphi 0, %s43
      %s63 = sphi 0, %s63
      %s65 = sphi 0, %s63
      %s66 = sphi 0, %s65
      %s80 = sphi 0, %s66
      %s84 = sphi 0, %s84
      %s86 = sphi 0, %s84
      %s87 = sphi 0, %s86
      %s101 = sphi 0, %s87
      %s107 = sphi 0, %s109
      %s110 = sphi 0, %s107
      %s111 = sphi 0, %s110
      %s127 = sphi 0, %s111
      %s135 = sphi 0, %s137
      %s138 = sphi 0, %s135
      %s139 = sphi 0, %s138
      %s155 = sphi 0, %s139
      %s163 = sphi 0, %s165
      %s166 = sphi 0, %s163
      %s167 = sphi 0, %s166
      %s183 = sphi 0, %s167
    $region4: #{tpu_custom_call.1} parent=1 // loop_header_branch
      %18 = sbr.rel (%p16) target = $region8
    $region5: #{tpu_custom_call.1} parent=1 // loop_body
      %s20 = ssub.s32 %s15, 1
      %s21 = ssub.s32 %s15, 2
      %s28 = sadd.s32 1, %s23
      %p29 = scmp.ge.s32.totalorder %s28, 1
      %s30 = scalar_select %p29, 0, %s28
      %s31 = sadd.s32 1, %s22
      %s32 = scalar_select %p29, %s31, %s22
      %p33 = scmp.ge.s32.totalorder %s32, 2
      %s34 = scalar_select %p33, 0, %s32
      %s35 = ssub.s32 %s22, %s34
      %s36 = ssub.s32 %s23, %s30
      %s37 = sor.u32 %s35, %s36
      %p38 = scmp.eq.s32.totalorder %s37, 0
      %s40 = sadd.s32 %s39, 1
      %s41 = scalar_select %p38, %s39, %s40
      %p44 = pneg %p38
      %p45 = scmp.eq.s32.totalorder %s15, 1
      %p46 = por %p44, %p45
      %p47 = scmp.ne.s32.totalorder %s39, %s42
      %p48 = scmp.eq.s32.totalorder %s15, 0
      %p49 = por %p47, %p48
      %p50 = scmp.ne.s32.totalorder %s39, %s42
      %p51 = scmp.eq.s32.totalorder %s20, 1
      %p52 = por %p50, %p51
      %p53 = scmp.ne.s32.totalorder %s42, %s43
      %p54 = scmp.eq.s32.totalorder %s20, 0
      %p55 = por %p53, %p54
      %p56 = scmp.ne.s32.totalorder %s42, %s43
      %p57 = scmp.eq.s32.totalorder %s21, 1
      %p58 = por %p56, %p57
      %p60 = scmp.ne.s32.totalorder %s43, %s59
      %p61 = scmp.eq.s32.totalorder %s21, 0
      %p62 = por %p60, %p61
      %s64 = sadd.s32 %s63, 1
      %p67 = scmp.eq.s32.totalorder %s15, 1
      %p68 = scmp.ne.s32.totalorder %s63, %s65
      %p69 = scmp.eq.s32.totalorder %s15, 0
      %p70 = por %p68, %p69
      %p71 = scmp.ne.s32.totalorder %s63, %s65
      %p72 = scmp.eq.s32.totalorder %s20, 1
      %p73 = por %p71, %p72
      %p74 = scmp.ne.s32.totalorder %s65, %s66
      %p75 = scmp.eq.s32.totalorder %s20, 0
      %p76 = por %p74, %p75
      %p77 = scmp.ne.s32.totalorder %s65, %s66
      %p78 = scmp.eq.s32.totalorder %s21, 1
      %p79 = por %p77, %p78
      %p81 = scmp.ne.s32.totalorder %s66, %s80
      %p82 = scmp.eq.s32.totalorder %s21, 0
      %p83 = por %p81, %p82
      %s85 = sadd.s32 %s84, 1
      %p88 = scmp.eq.s32.totalorder %s15, 1
      %p89 = scmp.ne.s32.totalorder %s84, %s86
      %p90 = scmp.eq.s32.totalorder %s15, 0
      %p91 = por %p89, %p90
      %p92 = scmp.ne.s32.totalorder %s84, %s86
      %p93 = scmp.eq.s32.totalorder %s20, 1
      %p94 = por %p92, %p93
      %p95 = scmp.ne.s32.totalorder %s86, %s87
      %p96 = scmp.eq.s32.totalorder %s20, 0
      %p97 = por %p95, %p96
      %p98 = scmp.ne.s32.totalorder %s86, %s87
      %p99 = scmp.eq.s32.totalorder %s21, 1
      %p100 = por %p98, %p99
      %p102 = scmp.ne.s32.totalorder %s87, %s101
      %p103 = scmp.eq.s32.totalorder %s21, 0
      %p104 = por %p102, %p103
      %s105 = ssub.s32 %s23, %s30
      %p106 = scmp.eq.s32.totalorder %s105, 0
      %s108 = sadd.s32 %s107, 1
      %s109 = scalar_select %p106, %s107, %s108
      %p112 = pneg %p106
      %p113 = scmp.eq.s32.totalorder %s15, 1
      %p114 = por %p112, %p113
      %p115 = scmp.ne.s32.totalorder %s107, %s110
      %p116 = scmp.eq.s32.totalorder %s15, 0
      %p117 = por %p115, %p116
      %p118 = scmp.ne.s32.totalorder %s107, %s110
      %p119 = scmp.eq.s32.totalorder %s20, 1
      %p120 = por %p118, %p119
      %p121 = scmp.ne.s32.totalorder %s110, %s111
      %p122 = scmp.eq.s32.totalorder %s20, 0
      %p123 = por %p121, %p122
      %p124 = scmp.ne.s32.totalorder %s110, %s111
      %p125 = scmp.eq.s32.totalorder %s21, 1
      %p126 = por %p124, %p125
      %p128 = scmp.ne.s32.totalorder %s111, %s127
      %p129 = scmp.eq.s32.totalorder %s21, 0
      %p130 = por %p128, %p129
      %s131 = ssub.s32 %s22, %s34
      %s132 = ssub.s32 %s23, %s30
      %s133 = sor.u32 %s131, %s132
      %p134 = scmp.eq.s32.totalorder %s133, 0
      %s136 = sadd.s32 %s135, 1
      %s137 = scalar_select %p134, %s135, %s136
      %p140 = pneg %p134
      %p141 = scmp.eq.s32.totalorder %s15, 1
      %p142 = por %p140, %p141
      %p143 = scmp.ne.s32.totalorder %s135, %s138
      %p144 = scmp.eq.s32.totalorder %s15, 0
      %p145 = por %p143, %p144
      %p146 = scmp.ne.s32.totalorder %s135, %s138
      %p147 = scmp.eq.s32.totalorder %s20, 1
      %p148 = por %p146, %p147
      %p149 = scmp.ne.s32.totalorder %s138, %s139
      %p150 = scmp.eq.s32.totalorder %s20, 0
      %p151 = por %p149, %p150
      %p152 = scmp.ne.s32.totalorder %s138, %s139
      %p153 = scmp.eq.s32.totalorder %s21, 1
      %p154 = por %p152, %p153
      %p156 = scmp.ne.s32.totalorder %s139, %s155
      %p157 = scmp.eq.s32.totalorder %s21, 0
      %p158 = por %p156, %p157
      %s159 = ssub.s32 %s22, %s34
      %s160 = ssub.s32 %s23, %s30
      %s161 = sor.u32 %s159, %s160
      %p162 = scmp.eq.s32.totalorder %s161, 0
      %s164 = sadd.s32 %s163, 1
      %s165 = scalar_select %p162, %s163, %s164
      %p168 = pneg %p162
      %p169 = scmp.eq.s32.totalorder %s15, 1
      %p170 = por %p168, %p169
      %p171 = scmp.ne.s32.totalorder %s163, %s166
      %p172 = scmp.eq.s32.totalorder %s15, 0
      %p173 = por %p171, %p172
      %p174 = scmp.ne.s32.totalorder %s163, %s166
      %p175 = scmp.eq.s32.totalorder %s20, 1
      %p176 = por %p174, %p175
      %p177 = scmp.ne.s32.totalorder %s166, %s167
      %p178 = scmp.eq.s32.totalorder %s20, 0
      %p179 = por %p177, %p178
      %p180 = scmp.ne.s32.totalorder %s166, %s167
      %p181 = scmp.eq.s32.totalorder %s21, 1
      %p182 = por %p180, %p181
      %p184 = scmp.ne.s32.totalorder %s167, %s183
      %p185 = scmp.eq.s32.totalorder %s21, 0
      %p186 = por %p184, %p185
      %p187 = scmp.le.s32.totalorder 1, %s15
      %p188 = scmp.lt.s32.totalorder %s15, 3
      %p189 = pnand %p187, %p188
      %p190 = pneg %p189
      // Predicated region
      $region9: #{tpu_custom_call.1} parent=5 // pred_check
        _
      $region10: #{tpu_custom_call.1} parent=5 // pred_check_branch
        %192 = sbr.rel (%p189) target = $region12
      $region11: #{tpu_custom_call.1} parent=5 // pred_region
        %s193 = ssub.s32 %s15, 1
        // Predicated region
        $region13: #{tpu_custom_call.1} parent=11 // pred_check
          %p194 = pneg %p76
        $region14: #{tpu_custom_call.1} parent=11 // pred_check_branch
          %196 = sbr.rel (%p194) target = $region16
        $region15: #{tpu_custom_call.1} parent=11 // pred_region
          _
        $region16: #{tpu_custom_call.1} parent=11 // pred_fallthru
          _
        // Predicated region
        $region17: #{tpu_custom_call.1} parent=11 // pred_check
          %p197 = pneg %p97
        $region18: #{tpu_custom_call.1} parent=11 // pred_check_branch
          %199 = sbr.rel (%p197) target = $region20
        $region19: #{tpu_custom_call.1} parent=11 // pred_region
          _
        $region20: #{tpu_custom_call.1} parent=11 // pred_fallthru
          _
        // Predicated region
        $region21: #{tpu_custom_call.1} parent=11 // pred_check
          %p200 = pneg %p123
        $region22: #{tpu_custom_call.1} parent=11 // pred_check_branch
          %202 = sbr.rel (%p200) target = $region24
        $region23: #{tpu_custom_call.1} parent=11 // pred_region
          %s203 = smul.u32 3, %s25
          %p204 = scmp.lt.s32.totalorder %s203, 2
          %s205 = scalar_select %p204, %s203, 2
          %s206 = scalar_lea.vmem %s3, %s205
          %s207 = smul.u32 3, %s25
        $region24: #{tpu_custom_call.1} parent=11 // pred_fallthru
          _
      $region12: #{tpu_custom_call.1} parent=5 // pred_fallthru
        _
      %p208 = scmp.lt.s32.totalorder %s15, 2
      // Predicated region
      $region25: #{tpu_custom_call.1} parent=5 // pred_check
        %p209 = pneg %p208
      $region26: #{tpu_custom_call.1} parent=5 // pred_check_branch
        %211 = sbr.rel (%p209) target = $region28
      $region27: #{tpu_custom_call.1} parent=5 // pred_region
        // Predicated region
        $region29: #{tpu_custom_call.1} parent=27 // pred_check
          %p212 = pneg %p49
        $region30: #{tpu_custom_call.1} parent=27 // pred_check_branch
          %214 = sbr.rel (%p212) target = $region32
        $region31: #{tpu_custom_call.1} parent=27 // pred_region
          %p215 = scmp.lt.s32.totalorder %s22, 1
          %s216 = scalar_select %p215, %s22, 1
          %p217 = scmp.lt.s32.totalorder %s23, 0
          %s218 = scalar_select %p217, %s23, 0
          %s219 = smul.addr %s218, 54
          %s220 = smul.addr %s216, 54
          %s221 = sadd.s32 %s219, %s220
          %s222 = smul.addr %s221, 4
          %s223 = scalar_lea.vmem %s0, %s222
        $region32: #{tpu_custom_call.1} parent=27 // pred_fallthru
          _
      $region28: #{tpu_custom_call.1} parent=5 // pred_fallthru
        _
      %p224 = scmp.le.s32.totalorder 1, %s15
      %p225 = scmp.lt.s32.totalorder %s15, 3
      %p226 = pnand %p224, %p225
      %p227 = pneg %p226
      // Predicated region
      $region33: #{tpu_custom_call.1} parent=5 // pred_check
        _
      $region34: #{tpu_custom_call.1} parent=5 // pred_check_branch
        %229 = sbr.rel (%p226) target = $region36
      $region35: #{tpu_custom_call.1} parent=5 // pred_region
        %s230 = ssub.s32 %s15, 1
        %p231 = scmp.lt.s32.totalorder %s24, 1
        %s232 = scalar_select %p231, %s24, 1
        %p233 = scmp.lt.s32.totalorder %s25, 0
        %s234 = scalar_select %p233, %s25, 0
        %s235 = smul.addr %s234, 54
        %s236 = smul.addr %s232, 54
        %s237 = sadd.s32 %s235, %s236
        %s238 = smul.addr %s237, 4
        %s239 = scalar_lea.vmem %s0, %s238
        %p240 = pneg %p55
        %p241 = pneg %p52
        %p242 = pneg %p76
        %p243 = pneg %p73
        %p244 = pneg %p97
        %p245 = pneg %p94
        %s246 = smul.u32 3, %s25
        %p247 = scmp.lt.s32.totalorder %s246, 2
        %s248 = scalar_select %p247, %s246, 2
        %s249 = scalar_lea.vmem %s3, %s248
        %p250 = pneg %p123
        %p251 = pneg %p120
        %p252 = pneg %p151
        %p253 = pneg %p148
        %s254 = sand.u32 %s138, 1
        %s255 = scalar_lea.sflag [#allocation3], %s254
        %s256 = sand.u32 %s138, 1
        %s257 = smul.addr %s256, 192
        %s258 = scalar_lea.vmem [#allocation2], %s257
        %p259 = pneg %p179
        %p260 = pneg %p176
        %p261 = scmp.lt.s32.totalorder %s24, 1
        %s262 = scalar_select %p261, %s24, 1
        %p263 = scmp.lt.s32.totalorder %s25, 0
        %s264 = scalar_select %p263, %s25, 0
        %s265 = smul.addr %s264, 16
        %s266 = smul.addr %s262, 16
        %s267 = sadd.s32 %s265, %s266
        %s268 = smul.addr %s267, 8
        %s269 = scalar_lea.vmem %s5, %s268
        %p270 = scmp.lt.s32.totalorder %s24, 1
        %s271 = scalar_select %p270, %s24, 1
        %p272 = scmp.lt.s32.totalorder %s25, 0
        %s273 = scalar_select %p272, %s25, 0
        %s274 = smul.addr %s273, 54
        %s275 = smul.addr %s271, 54
        %s276 = sadd.s32 %s274, %s275
        %s277 = smul.addr %s276, 4
        %s278 = scalar_lea.vmem %s0, %s277
        %s279 = smul.u32 3, %s25
        %p280 = scmp.lt.s32.totalorder %s279, 2
        %s281 = scalar_select %p280, %s279, 2
        %s282 = scalar_lea.vmem %s3, %s281
        %s283 = smul.u32 3, %s25
        %s284 = smul.u32 3, %s25
        %p285 = scmp.lt.s32.totalorder %s24, 1
        %s286 = scalar_select %p285, %s24, 1
        %p287 = scmp.lt.s32.totalorder %s25, 0
        %s288 = scalar_select %p287, %s25, 0
        %s289 = smul.addr %s288, 16
        %s290 = smul.addr %s286, 16
        %s291 = sadd.s32 %s289, %s290
        %s292 = smul.addr %s291, 8
        %s293 = scalar_lea.vmem %s5, %s292
        %v295 = vld [vmem:[%s278] sm:$0xf]
        %v296 = vld [vmem:[%s278 + $0x4] sm:$0xf]
        %v297 = vld [vmem:[%s278 + $0x8] sm:$0xf]
        %v298 = vld [vmem:[%s278 + $0xc] sm:$0xf]
        %v299 = vld [vmem:[%s278 + $0x10] sm:$0xf]
        %v300 = vld [vmem:[%s278 + $0x14] sm:$0xf]
        %v301 = vld [vmem:[%s278 + $0x18] sm:$0xf]
        %v302 = vld [vmem:[%s278 + $0x1c] sm:$0xf]
        %v303 = vld [vmem:[%s278 + $0x20] sm:$0xf]
        %v304 = vld [vmem:[%s278 + $0x24] sm:$0xf]
        %v305 = vld [vmem:[%s278 + $0x28] sm:$0xf]
        %v306 = vld [vmem:[%s278 + $0x2c] sm:$0xf]
        %v307 = vld [vmem:[%s278 + $0x30] sm:$0xf]
        %v308 = vld [vmem:[%s278 + $0x34] sm:$0xf]
        %v309 = vld [vmem:[%s278 + $0x38] sm:$0xf]
        %v310 = vld [vmem:[%s278 + $0x3c] sm:$0xf]
        %v311 = vld [vmem:[%s278 + $0x40] sm:$0xf]
        %v312 = vld [vmem:[%s278 + $0x44] sm:$0xf]
        %v313 = vld [vmem:[%s278 + $0x48] sm:$0xf]
        %v314 = vld [vmem:[%s278 + $0x4c] sm:$0xf]
        %v315 = vld [vmem:[%s278 + $0x50] sm:$0xf]
        %v316 = vld [vmem:[%s278 + $0x54] sm:$0xf]
        %v317 = vld [vmem:[%s278 + $0x58] sm:$0xf]
        %v318 = vld [vmem:[%s278 + $0x5c] sm:$0xf]
        %v319 = vld [vmem:[%s278 + $0x60] sm:$0xf]
        %v320 = vld [vmem:[%s278 + $0x64] sm:$0xf]
        %v321 = vld [vmem:[%s278 + $0x68] sm:$0xf]
        %v322 = vld [vmem:[%s278 + $0x6c] sm:$0xf]
        %v323 = vld [vmem:[%s278 + $0x70] sm:$0xf]
        %v324 = vld [vmem:[%s278 + $0x74] sm:$0xf]
        %v325 = vld [vmem:[%s278 + $0x78] sm:$0xf]
        %v326 = vld [vmem:[%s278 + $0x7c] sm:$0xf]
        %v327 = vld [vmem:[%s278 + $0x80] sm:$0xf]
        %v328 = vld [vmem:[%s278 + $0x84] sm:$0xf]
        %v329 = vld [vmem:[%s278 + $0x88] sm:$0xf]
        %v330 = vld [vmem:[%s278 + $0x8c] sm:$0xf]
        %v331 = vld [vmem:[%s278 + $0x90] sm:$0xf]
        %v332 = vld [vmem:[%s278 + $0x94] sm:$0xf]
        %v333 = vld [vmem:[%s278 + $0x98] sm:$0xf]
        %v334 = vld [vmem:[%s278 + $0x9c] sm:$0xf]
        %v335 = vld [vmem:[%s278 + $0xa0] sm:$0xf]
        %v336 = vld [vmem:[%s278 + $0xa4] sm:$0xf]
        %v337 = vld [vmem:[%s278 + $0xa8] sm:$0xf]
        %v338 = vld [vmem:[%s278 + $0xac] sm:$0xf]
        %v339 = vld [vmem:[%s278 + $0xb0] sm:$0xf]
        %v340 = vld [vmem:[%s278 + $0xb4] sm:$0xf]
        %v341 = vld [vmem:[%s278 + $0xb8] sm:$0xf]
        %v342 = vld [vmem:[%s278 + $0xbc] sm:$0xf]
        %v343 = vld [vmem:[%s278 + $0xc0] sm:$0xf]
        %v344 = vld [vmem:[%s278 + $0xc4] sm:$0xf]
        %v345 = vld [vmem:[%s278 + $0xc8] sm:$0xf]
        %v346 = vld [vmem:[%s278 + $0xcc] sm:$0xf]
        %v347 = vld [vmem:[%s278 + $0xd0] sm:$0xf]
        %v348 = vld [vmem:[%s278 + $0xd4] sm:$0xf]
        %v397 = vunpack.c.l.b16 %v295
        %v398 = vunpack.c.l.b16 %v296
        %v399 = vunpack.c.l.b16 %v297
        %v400 = vunpack.c.l.b16 %v298
        %v401 = vunpack.c.l.b16 %v299
        %v402 = vunpack.c.l.b16 %v300
        %v403 = vunpack.c.l.b16 %v301
        %v404 = vunpack.c.l.b16 %v302
        %v405 = vunpack.c.l.b16 %v303
        %v406 = vunpack.c.l.b16 %v304
        %v407 = vunpack.c.l.b16 %v305
        %v408 = vunpack.c.l.b16 %v306
        %v409 = vunpack.c.l.b16 %v307
        %v410 = vunpack.c.l.b16 %v308
        %v411 = vunpack.c.l.b16 %v309
        %v412 = vunpack.c.l.b16 %v310
        %v413 = vunpack.c.l.b16 %v311
        %v414 = vunpack.c.l.b16 %v312
        %v415 = vunpack.c.l.b16 %v313
        %v416 = vunpack.c.l.b16 %v314
        %v417 = vunpack.c.l.b16 %v315
        %v418 = vunpack.c.l.b16 %v316
        %v419 = vunpack.c.l.b16 %v317
        %v420 = vunpack.c.l.b16 %v318
        %v421 = vunpack.c.l.b16 %v319
        %v422 = vunpack.c.l.b16 %v320
        %v423 = vunpack.c.l.b16 %v321
        %v424 = vunpack.c.l.b16 %v322
        %v425 = vunpack.c.l.b16 %v323
        %v426 = vunpack.c.l.b16 %v324
        %v427 = vunpack.c.l.b16 %v325
        %v428 = vunpack.c.l.b16 %v326
        %v429 = vunpack.c.l.b16 %v327
        %v430 = vunpack.c.l.b16 %v328
        %v431 = vunpack.c.l.b16 %v329
        %v432 = vunpack.c.l.b16 %v330
        %v433 = vunpack.c.l.b16 %v331
        %v434 = vunpack.c.l.b16 %v332
        %v435 = vunpack.c.l.b16 %v333
        %v436 = vunpack.c.l.b16 %v334
        %v437 = vunpack.c.l.b16 %v335
        %v438 = vunpack.c.l.b16 %v336
        %v439 = vunpack.c.l.b16 %v337
        %v440 = vunpack.c.l.b16 %v338
        %v441 = vunpack.c.l.b16 %v339
        %v442 = vunpack.c.l.b16 %v340
        %v443 = vunpack.c.l.b16 %v341
        %v444 = vunpack.c.l.b16 %v342
        %v445 = vpack.c.b16 %v398, %v397
        %v446 = vpack.c.b16 %v400, %v399
        %v447 = vpack.c.b16 %v402, %v401
        %v448 = vpack.c.b16 %v404, %v403
        %v449 = vpack.c.b16 %v406, %v405
        %v450 = vpack.c.b16 %v408, %v407
        %v451 = vpack.c.b16 %v410, %v409
        %v452 = vpack.c.b16 %v412, %v411
        %v453 = vpack.c.b16 %v414, %v413
        %v454 = vpack.c.b16 %v416, %v415
        %v455 = vpack.c.b16 %v418, %v417
        %v456 = vpack.c.b16 %v420, %v419
        %v457 = vpack.c.b16 %v422, %v421
        %v458 = vpack.c.b16 %v424, %v423
        %v459 = vpack.c.b16 %v426, %v425
        %v460 = vpack.c.b16 %v428, %v427
        %v461 = vpack.c.b16 %v430, %v429
        %v462 = vpack.c.b16 %v432, %v431
        %v463 = vpack.c.b16 %v434, %v433
        %v464 = vpack.c.b16 %v436, %v435
        %v465 = vpack.c.b16 %v438, %v437
        %v466 = vpack.c.b16 %v440, %v439
        %v467 = vpack.c.b16 %v442, %v441
        %v468 = vpack.c.b16 %v444, %v443
        %v472 = vunpack.c.l.b16 %v343
        %v473 = vunpack.c.l.b16 %v344
        %v474 = vunpack.c.l.b16 %v345
        %v475 = vpack.c.b16 %v401, %v400
        %v476 = vpack.c.b16 %v403, %v402
        %v477 = vpack.c.b16 %v405, %v404
        %v478 = vpack.c.b16 %v407, %v406
        %v479 = vpack.c.b16 %v409, %v408
        %v480 = vpack.c.b16 %v411, %v410
        %v481 = vpack.c.b16 %v413, %v412
        %v482 = vpack.c.b16 %v415, %v414
        %v483 = vpack.c.b16 %v417, %v416
        %v484 = vpack.c.b16 %v419, %v418
        %v485 = vpack.c.b16 %v421, %v420
        %v486 = vpack.c.b16 %v423, %v422
        %v487 = vpack.c.b16 %v425, %v424
        %v488 = vpack.c.b16 %v427, %v426
        %v489 = vpack.c.b16 %v429, %v428
        %v490 = vpack.c.b16 %v431, %v430
        %v491 = vpack.c.b16 %v433, %v432
        %v492 = vpack.c.b16 %v435, %v434
        %v493 = vpack.c.b16 %v437, %v436
        %v494 = vpack.c.b16 %v439, %v438
        %v495 = vpack.c.b16 %v441, %v440
        %v496 = vpack.c.b16 %v443, %v442
        %v497 = vpack.c.b16 %v472, %v444
        %v498 = vpack.c.b16 %v474, %v473
        %499 = vrot.lane.b32.xlu0 %v475, 12
        %v500 = vpop.permute.xlu0 %499
        %501 = vrot.lane.b32.xlu0 %v476, 12
        %v502 = vpop.permute.xlu0 %501
        %503 = vrot.lane.b32.xlu0 %v477, 12
        %v504 = vpop.permute.xlu0 %503
        %505 = vrot.lane.b32.xlu0 %v478, 12
        %v506 = vpop.permute.xlu0 %505
        %507 = vrot.lane.b32.xlu0 %v479, 12
        %v508 = vpop.permute.xlu0 %507
        %509 = vrot.lane.b32.xlu0 %v480, 12
        %v510 = vpop.permute.xlu0 %509
        %511 = vrot.lane.b32.xlu0 %v481, 12
        %v512 = vpop.permute.xlu0 %511
        %513 = vrot.lane.b32.xlu0 %v482, 12
        %v514 = vpop.permute.xlu0 %513
        %515 = vrot.lane.b32.xlu0 %v483, 12
        %v516 = vpop.permute.xlu0 %515
        %517 = vrot.lane.b32.xlu0 %v484, 12
        %v518 = vpop.permute.xlu0 %517
        %519 = vrot.lane.b32.xlu0 %v485, 12
        %v520 = vpop.permute.xlu0 %519
        %521 = vrot.lane.b32.xlu0 %v486, 12
        %v522 = vpop.permute.xlu0 %521
        %523 = vrot.lane.b32.xlu0 %v487, 12
        %v524 = vpop.permute.xlu0 %523
        %525 = vrot.lane.b32.xlu0 %v488, 12
        %v526 = vpop.permute.xlu0 %525
        %527 = vrot.lane.b32.xlu0 %v489, 12
        %v528 = vpop.permute.xlu0 %527
        %529 = vrot.lane.b32.xlu0 %v490, 12
        %v530 = vpop.permute.xlu0 %529
        %531 = vrot.lane.b32.xlu0 %v491, 12
        %v532 = vpop.permute.xlu0 %531
        %533 = vrot.lane.b32.xlu0 %v492, 12
        %v534 = vpop.permute.xlu0 %533
        %535 = vrot.lane.b32.xlu0 %v493, 12
        %v536 = vpop.permute.xlu0 %535
        %537 = vrot.lane.b32.xlu0 %v494, 12
        %v538 = vpop.permute.xlu0 %537
        %539 = vrot.lane.b32.xlu0 %v495, 12
        %v540 = vpop.permute.xlu0 %539
        %541 = vrot.lane.b32.xlu0 %v496, 12
        %v542 = vpop.permute.xlu0 %541
        %543 = vrot.lane.b32.xlu0 %v497, 12
        %v544 = vpop.permute.xlu0 %543
        %545 = vrot.lane.b32.xlu0 %v498, 12
        %v546 = vpop.permute.xlu0 %545
        %v550 = vunpack.c.l.b16 %v346
        %v551 = vunpack.c.l.b16 %v347
        %v552 = vunpack.c.l.b16 %v348
        %v553 = vpack.c.b16 %v473, %v472
        %v554 = vpack.c.b16 %v550, %v474
        %v555 = vpack.c.b16 %v552, %v551
        %556 = vrot.lane.b32.xlu0 %v448, 24
        %v557 = vpop.permute.xlu0 %556
        %558 = vrot.lane.b32.xlu0 %v449, 24
        %v559 = vpop.permute.xlu0 %558
        %560 = vrot.lane.b32.xlu0 %v450, 24
        %v561 = vpop.permute.xlu0 %560
        %562 = vrot.lane.b32.xlu0 %v451, 24
        %v563 = vpop.permute.xlu0 %562
        %564 = vrot.lane.b32.xlu0 %v452, 24
        %v565 = vpop.permute.xlu0 %564
        %566 = vrot.lane.b32.xlu0 %v453, 24
        %v567 = vpop.permute.xlu0 %566
        %568 = vrot.lane.b32.xlu0 %v454, 24
        %v569 = vpop.permute.xlu0 %568
        %570 = vrot.lane.b32.xlu0 %v455, 24
        %v571 = vpop.permute.xlu0 %570
        %572 = vrot.lane.b32.xlu0 %v456, 24
        %v573 = vpop.permute.xlu0 %572
        %574 = vrot.lane.b32.xlu0 %v457, 24
        %v575 = vpop.permute.xlu0 %574
        %576 = vrot.lane.b32.xlu0 %v458, 24
        %v577 = vpop.permute.xlu0 %576
        %578 = vrot.lane.b32.xlu0 %v459, 24
        %v579 = vpop.permute.xlu0 %578
        %580 = vrot.lane.b32.xlu0 %v460, 24
        %v581 = vpop.permute.xlu0 %580
        %582 = vrot.lane.b32.xlu0 %v461, 24
        %v583 = vpop.permute.xlu0 %582
        %584 = vrot.lane.b32.xlu0 %v462, 24
        %v585 = vpop.permute.xlu0 %584
        %586 = vrot.lane.b32.xlu0 %v463, 24
        %v587 = vpop.permute.xlu0 %586
        %588 = vrot.lane.b32.xlu0 %v464, 24
        %v589 = vpop.permute.xlu0 %588
        %590 = vrot.lane.b32.xlu0 %v465, 24
        %v591 = vpop.permute.xlu0 %590
        %592 = vrot.lane.b32.xlu0 %v466, 24
        %v593 = vpop.permute.xlu0 %592
        %594 = vrot.lane.b32.xlu0 %v467, 24
        %v595 = vpop.permute.xlu0 %594
        %596 = vrot.lane.b32.xlu0 %v468, 24
        %v597 = vpop.permute.xlu0 %596
        %598 = vrot.lane.b32.xlu0 %v553, 24
        %v599 = vpop.permute.xlu0 %598
        %600 = vrot.lane.b32.xlu0 %v554, 24
        %v601 = vpop.permute.xlu0 %600
        %602 = vrot.lane.b32.xlu0 %v555, 24
        %v603 = vpop.permute.xlu0 %602
        %vm604 = vcmask 97280
        %v607 = vsel %vm604, %v445, %v500
        %v610 = vsel %vm604, %v446, %v502
        %v613 = vsel %vm604, %v447, %v504
        %v616 = vsel %vm604, %v448, %v506
        %v619 = vsel %vm604, %v449, %v508
        %v622 = vsel %vm604, %v450, %v510
        %v625 = vsel %vm604, %v451, %v512
        %v628 = vsel %vm604, %v452, %v514
        %v631 = vsel %vm604, %v453, %v516
        %v634 = vsel %vm604, %v454, %v518
        %v637 = vsel %vm604, %v455, %v520
        %v640 = vsel %vm604, %v456, %v522
        %v643 = vsel %vm604, %v457, %v524
        %v646 = vsel %vm604, %v458, %v526
        %v649 = vsel %vm604, %v459, %v528
        %v652 = vsel %vm604, %v460, %v530
        %v655 = vsel %vm604, %v461, %v532
        %v658 = vsel %vm604, %v462, %v534
        %v661 = vsel %vm604, %v463, %v536
        %v664 = vsel %vm604, %v464, %v538
        %v667 = vsel %vm604, %v465, %v540
        %v670 = vsel %vm604, %v466, %v542
        %v673 = vsel %vm604, %v467, %v544
        %v676 = vsel %vm604, %v468, %v546
        %vm677 = vcmask 195584
        %v679 = vsel %vm677, %v607, %v557
        %v681 = vsel %vm677, %v610, %v559
        %v683 = vsel %vm677, %v613, %v561
        %v685 = vsel %vm677, %v616, %v563
        %v687 = vsel %vm677, %v619, %v565
        %v689 = vsel %vm677, %v622, %v567
        %v691 = vsel %vm677, %v625, %v569
        %v693 = vsel %vm677, %v628, %v571
        %v695 = vsel %vm677, %v631, %v573
        %v697 = vsel %vm677, %v634, %v575
        %v699 = vsel %vm677, %v637, %v577
        %v701 = vsel %vm677, %v640, %v579
        %v703 = vsel %vm677, %v643, %v581
        %v705 = vsel %vm677, %v646, %v583
        %v707 = vsel %vm677, %v649, %v585
        %v709 = vsel %vm677, %v652, %v587
        %v711 = vsel %vm677, %v655, %v589
        %v713 = vsel %vm677, %v658, %v591
        %v715 = vsel %vm677, %v661, %v593
        %v717 = vsel %vm677, %v664, %v595
        %v719 = vsel %vm677, %v667, %v597
        %v721 = vsel %vm677, %v670, %v599
        %v723 = vsel %vm677, %v673, %v601
        %v725 = vsel %vm677, %v676, %v603
        %v726 = vld [vmem:[%s1] sm:$0xf]
        %v727 = vld [vmem:[%s1 + $0x4] sm:$0xf]
        %v728 = vld [vmem:[%s1 + $0x8] sm:$0xf]
        %v729 = vld [vmem:[%s1 + $0xc] sm:$0xf]
        %v730 = vld [vmem:[%s1 + $0x10] sm:$0xf]
        %v731 = vld [vmem:[%s1 + $0x14] sm:$0xf]
        %v732 = vld [vmem:[%s1 + $0x18] sm:$0xf]
        %v733 = vld [vmem:[%s1 + $0x1c] sm:$0xf]
        %v734 = vld [vmem:[%s1 + $0x20] sm:$0xf]
        %v735 = vld [vmem:[%s1 + $0x24] sm:$0xf]
        %v736 = vld [vmem:[%s1 + $0x28] sm:$0xf]
        %v737 = vld [vmem:[%s1 + $0x2c] sm:$0xf]
        %v738 = vld [vmem:[%s1 + $0x30] sm:$0xf]
        %v739 = vld [vmem:[%s1 + $0x34] sm:$0xf]
        %v740 = vld [vmem:[%s1 + $0x38] sm:$0xf]
        %v741 = vld [vmem:[%s1 + $0x3c] sm:$0xf]
        %v742 = vld [vmem:[%s2] sm:$0xff]
        %v743 = vld [vmem:[%s2 + $0x8] sm:$0xff]
        %v744 = vld [vmem:[%s2 + $0x10] sm:$0xff]
        %v745 = vld [vmem:[%s2 + $0x18] sm:$0xff]
        %v746 = vld [vmem:[%s2 + $0x20] sm:$0xff]
        %v747 = vld [vmem:[%s2 + $0x28] sm:$0xff]
        %v748 = vld [vmem:[%s2 + $0x30] sm:$0xff]
        %v749 = vld [vmem:[%s2 + $0x38] sm:$0xff]
        %v750 = vld [vmem:[%s2 + $0x40] sm:$0xff]
        %v751 = vld [vmem:[%s2 + $0x48] sm:$0xff]
        %v752 = vld [vmem:[%s2 + $0x50] sm:$0xff]
        %v753 = vld [vmem:[%s2 + $0x58] sm:$0xff]
        %v754 = vld [vmem:[%s2 + $0x60] sm:$0xff]
        %v755 = vld [vmem:[%s2 + $0x68] sm:$0xff]
        %v756 = vld [vmem:[%s2 + $0x70] sm:$0xff]
        %v757 = vld [vmem:[%s2 + $0x78] sm:$0xff]
        %759 = vset.pattern.permute.xlu0 0
        %760 = vperm.xlu0 %759, %v742
        %v761 = vpop.permute.xlu0 %760
        %764 = vset.pattern.permute.xlu0 0
        %765 = vperm.xlu0 %764, %v743
        %v766 = vpop.permute.xlu0 %765
        %769 = vset.pattern.permute.xlu0 0
        %770 = vperm.xlu0 %769, %v744
        %v771 = vpop.permute.xlu0 %770
        %774 = vset.pattern.permute.xlu0 0
        %775 = vperm.xlu0 %774, %v745
        %v776 = vpop.permute.xlu0 %775
        %779 = vset.pattern.permute.xlu0 0
        %780 = vperm.xlu0 %779, %v746
        %v781 = vpop.permute.xlu0 %780
        %784 = vset.pattern.permute.xlu0 0
        %785 = vperm.xlu0 %784, %v747
        %v786 = vpop.permute.xlu0 %785
        %789 = vset.pattern.permute.xlu0 0
        %790 = vperm.xlu0 %789, %v748
        %v791 = vpop.permute.xlu0 %790
        %794 = vset.pattern.permute.xlu0 0
        %795 = vperm.xlu0 %794, %v749
        %v796 = vpop.permute.xlu0 %795
        %799 = vset.pattern.permute.xlu0 0
        %800 = vperm.xlu0 %799, %v750
        %v801 = vpop.permute.xlu0 %800
        %804 = vset.pattern.permute.xlu0 0
        %805 = vperm.xlu0 %804, %v751
        %v806 = vpop.permute.xlu0 %805
        %809 = vset.pattern.permute.xlu0 0
        %810 = vperm.xlu0 %809, %v752
        %v811 = vpop.permute.xlu0 %810
        %814 = vset.pattern.permute.xlu0 0
        %815 = vperm.xlu0 %814, %v753
        %v816 = vpop.permute.xlu0 %815
        %819 = vset.pattern.permute.xlu0 0
        %820 = vperm.xlu0 %819, %v754
        %v821 = vpop.permute.xlu0 %820
        %824 = vset.pattern.permute.xlu0 0
        %825 = vperm.xlu0 %824, %v755
        %v826 = vpop.permute.xlu0 %825
        %829 = vset.pattern.permute.xlu0 0
        %830 = vperm.xlu0 %829, %v756
        %v831 = vpop.permute.xlu0 %830
        %834 = vset.pattern.permute.xlu0 0
        %835 = vperm.xlu0 %834, %v757
        %v836 = vpop.permute.xlu0 %835
        %v854 = vunpack.c.l.b16 %v726
        %v855 = vunpack.c.l.b16 %v727
        %v856 = vunpack.c.l.b16 %v728
        %v857 = vunpack.c.l.b16 %v729
        %v858 = vunpack.c.l.b16 %v730
        %v859 = vunpack.c.l.b16 %v731
        %v860 = vunpack.c.l.b16 %v732
        %v861 = vunpack.c.l.b16 %v733
        %v862 = vunpack.c.l.b16 %v734
        %v863 = vunpack.c.l.b16 %v735
        %v864 = vunpack.c.l.b16 %v736
        %v865 = vunpack.c.l.b16 %v737
        %v866 = vunpack.c.l.b16 %v738
        %v867 = vunpack.c.l.b16 %v739
        %v868 = vunpack.c.l.b16 %v740
        %v869 = vunpack.c.l.b16 %v741
        %v870 = vpack.c.b16 %v855, %v854
        %v871 = vpack.c.b16 %v857, %v856
        %v872 = vpack.c.b16 %v859, %v858
        %v873 = vpack.c.b16 %v861, %v860
        %v874 = vpack.c.b16 %v863, %v862
        %v875 = vpack.c.b16 %v865, %v864
        %v876 = vpack.c.b16 %v867, %v866
        %v877 = vpack.c.b16 %v869, %v868
        %vm878 = vcmask 293888
        %v880 = vsel %vm878, %v870, 0
        %v883 = vsel %vm878, %v871, 0
        %v886 = vsel %vm878, %v872, 0
        %v889 = vsel %vm878, %v873, 0
        %v892 = vsel %vm878, %v874, 0
        %v895 = vsel %vm878, %v875, 0
        %v898 = vsel %vm878, %v876, 0
        %v901 = vsel %vm878, %v877, 0
        %v903 = vsel %vm878, %v679, 0
        %v905 = vsel %vm878, %v681, 0
        %v907 = vsel %vm878, %v683, 0
        %v909 = vsel %vm878, %v685, 0
        %v911 = vsel %vm878, %v687, 0
        %v913 = vsel %vm878, %v689, 0
        %v915 = vsel %vm878, %v691, 0
        %v917 = vsel %vm878, %v693, 0
        %v919 = vsel %vm878, %v695, 0
        %v921 = vsel %vm878, %v697, 0
        %v923 = vsel %vm878, %v699, 0
        %v925 = vsel %vm878, %v701, 0
        %v927 = vsel %vm878, %v703, 0
        %v929 = vsel %vm878, %v705, 0
        %v931 = vsel %vm878, %v707, 0
        %v933 = vsel %vm878, %v709, 0
        %v935 = vsel %vm878, %v711, 0
        %v937 = vsel %vm878, %v713, 0
        %v939 = vsel %vm878, %v715, 0
        %v941 = vsel %vm878, %v717, 0
        %v943 = vsel %vm878, %v719, 0
        %v945 = vsel %vm878, %v721, 0
        %v947 = vsel %vm878, %v723, 0
        %v949 = vsel %vm878, %v725, 0
        %951 = vmatprep.subr.bf16.mxu0 0
        %952 = vmatpush1.bf16.xpose.msra.mxu0 %v903
        %953 = vmatprep.subr.bf16.mxu0 0
        %954 = vmatpush1.bf16.xpose.msra.mxu0 %v905
        %955 = vmatprep.subr.bf16.mxu0 0
        %956 = vmatpush1.bf16.xpose.msra.mxu0 %v907
        %957 = vmatprep.subr.bf16.mxu0 0
        %958 = vmatpush1.bf16.xpose.msra.mxu0 %v909
        %959 = vmatprep.subr.bf16.mxu0 0
        %960 = vmatpush1.bf16.xpose.msra.mxu0 %v911
        %961 = vmatprep.subr.bf16.mxu0 0
        %962 = vmatpush1.bf16.xpose.msra.mxu0 %v913
        %963 = vmatprep.subr.bf16.mxu0 0
        %964 = vmatpush1.bf16.xpose.msra.mxu0 %v915
        %965 = vmatprep.subr.bf16.mxu0 0
        %966 = vmatpush1.bf16.xpose.msra.mxu0 %v917
        %967 = vmatprep.subr.bf16.mxu0 0
        %968 = vmatpush1.bf16.xpose.msra.mxu0 %v919
        %969 = vmatprep.subr.bf16.mxu0 0
        %970 = vmatpush1.bf16.xpose.msra.mxu0 %v921
        %971 = vmatprep.subr.bf16.mxu0 0
        %972 = vmatpush1.bf16.xpose.msra.mxu0 %v923
        %973 = vmatprep.subr.bf16.mxu0 0
        %974 = vmatpush1.bf16.xpose.msra.mxu0 %v925
        %975 = vmatprep.subr.bf16.mxu0 0
        %976 = vmatpush1.bf16.xpose.msra.mxu0 %v927
        %977 = vmatprep.subr.bf16.mxu0 0
        %978 = vmatpush1.bf16.xpose.msra.mxu0 %v929
        %979 = vmatprep.subr.bf16.mxu0 0
        %980 = vmatpush1.bf16.xpose.msra.mxu0 %v931
        %981 = vmatprep.subr.bf16.mxu0 0
        %982 = vmatpush1.bf16.xpose.msra.mxu0 %v933
        %983 = vmatprep.mubr.bf16.mxu0 0
        %984 = vmatmul.mubr.bf16.gmra.mrb[0].mxu0 %v880
        %v985 = vpop.f32.mrb[0].mxu0
        %v986 = vadd.f32 %v761, %v985
        %v987 = vpop.f32.mrb[0].mxu0
        %v988 = vadd.f32 %v761, %v987
        %v989 = vpop.f32.mrb[0].mxu0
        %v990 = vadd.f32 %v766, %v989
        %v991 = vpop.f32.mrb[0].mxu0
        %v992 = vadd.f32 %v766, %v991
        %993 = vmatprep.mubr.bf16.mxu0 0
        %994 = vmatmul.mubr.bf16.gmra.mrb[0].mxu0 %v883
        %v995 = vpop.f32.mrb[0].mxu0
        %v996 = vadd.f32 %v771, %v995
        %v997 = vpop.f32.mrb[0].mxu0
        %v998 = vadd.f32 %v771, %v997
        %v999 = vpop.f32.mrb[0].mxu0
        %v1000 = vadd.f32 %v776, %v999
        %v1001 = vpop.f32.mrb[0].mxu0
        %v1002 = vadd.f32 %v776, %v1001
        %1003 = vmatprep.mubr.bf16.mxu0 0
        %1004 = vmatmul.mubr.bf16.gmra.mrb[0].mxu0 %v886
        %v1005 = vpop.f32.mrb[0].mxu0
        %v1006 = vadd.f32 %v781, %v1005
        %v1007 = vpop.f32.mrb[0].mxu0
        %v1008 = vadd.f32 %v781, %v1007
        %v1009 = vpop.f32.mrb[0].mxu0
        %v1010 = vadd.f32 %v786, %v1009
        %v1011 = vpop.f32.mrb[0].mxu0
        %v1012 = vadd.f32 %v786, %v1011
        %1013 = vmatprep.mubr.bf16.mxu0 0
        %1014 = vmatmul.mubr.bf16.gmra.mrb[0].mxu0 %v889
        %v1015 = vpop.f32.mrb[0].mxu0
        %v1016 = vadd.f32 %v791, %v1015
        %v1017 = vpop.f32.mrb[0].mxu0
        %v1018 = vadd.f32 %v791, %v1017
        %v1019 = vpop.f32.mrb[0].mxu0
        %v1020 = vadd.f32 %v796, %v1019
        %v1021 = vpop.f32.mrb[0].mxu0
        %v1022 = vadd.f32 %v796, %v1021
        %1023 = vmatprep.mubr.bf16.mxu0 0
        %1024 = vmatmul.mubr.bf16.gmra.mrb[0].mxu0 %v892
        %v1025 = vpop.f32.mrb[0].mxu0
        %v1026 = vadd.f32 %v801, %v1025
        %v1027 = vpop.f32.mrb[0].mxu0
        %v1028 = vadd.f32 %v801, %v1027
        %v1029 = vpop.f32.mrb[0].mxu0
        %v1030 = vadd.f32 %v806, %v1029
        %v1031 = vpop.f32.mrb[0].mxu0
        %v1032 = vadd.f32 %v806, %v1031
        %1033 = vmatprep.mubr.bf16.mxu0 0
        %1034 = vmatmul.mubr.bf16.gmra.mrb[0].mxu0 %v895
        %v1035 = vpop.f32.mrb[0].mxu0
        %v1036 = vadd.f32 %v811, %v1035
        %v1037 = vpop.f32.mrb[0].mxu0
        %v1038 = vadd.f32 %v811, %v1037
        %v1039 = vpop.f32.mrb[0].mxu0
        %v1040 = vadd.f32 %v816, %v1039
        %v1041 = vpop.f32.mrb[0].mxu0
        %v1042 = vadd.f32 %v816, %v1041
        %1043 = vmatprep.mubr.bf16.mxu0 0
        %1044 = vmatmul.mubr.bf16.gmra.mrb[0].mxu0 %v898
        %v1045 = vpop.f32.mrb[0].mxu0
        %v1046 = vadd.f32 %v821, %v1045
        %v1047 = vpop.f32.mrb[0].mxu0
        %v1048 = vadd.f32 %v821, %v1047
        %v1049 = vpop.f32.mrb[0].mxu0
        %v1050 = vadd.f32 %v826, %v1049
        %v1051 = vpop.f32.mrb[0].mxu0
        %v1052 = vadd.f32 %v826, %v1051
        %1053 = vmatprep.mubr.bf16.mxu0 0
        %1054 = vmatmul.mubr.bf16.gmra.mrb[0].mxu0 %v901
        %v1055 = vpop.f32.mrb[0].mxu0
        %v1056 = vadd.f32 %v831, %v1055
        %v1057 = vpop.f32.mrb[0].mxu0
        %v1058 = vadd.f32 %v831, %v1057
        %v1059 = vpop.f32.mrb[0].mxu0
        %v1060 = vadd.f32 %v836, %v1059
        %v1061 = vpop.f32.mrb[0].mxu0
        %v1062 = vadd.f32 %v836, %v1061
        %1063 = vdwg.mxu0
        %1064 = vmatprep.subr.bf16.mxu0 0
        %1065 = vmatpush1.bf16.xpose.msra.mxu0 %v935
        %1066 = vmatprep.subr.bf16.mxu0 0
        %1067 = vmatpush1.bf16.xpose.msra.mxu0 %v937
        %1068 = vmatprep.subr.bf16.mxu0 0
        %1069 = vmatpush1.bf16.xpose.msra.mxu0 %v939
        %1070 = vmatprep.subr.bf16.mxu0 0
        %1071 = vmatpush1.bf16.xpose.msra.mxu0 %v941
        %1072 = vmatprep.subr.bf16.mxu0 0
        %1073 = vmatpush1.bf16.xpose.msra.mxu0 %v943
        %1074 = vmatprep.subr.bf16.mxu0 0
        %1075 = vmatpush1.bf16.xpose.msra.mxu0 %v945
        %1076 = vmatprep.subr.bf16.mxu0 0
        %1077 = vmatpush1.bf16.xpose.msra.mxu0 %v947
        %1078 = vmatprep.subr.bf16.mxu0 0
        %1079 = vmatpush1.bf16.xpose.msra.mxu0 %v949
        %1080 = vmatprep.subr.bf16.mxu0 0
        %1081 = vmatpush1.bf16.xpose.msra.mxu0 0
        %1082 = vmatprep.subr.bf16.mxu0 0
        %1083 = vmatpush1.bf16.xpose.msra.mxu0 0
        %1084 = vmatprep.subr.bf16.mxu0 0
        %1085 = vmatpush1.bf16.xpose.msra.mxu0 0
        %1086 = vmatprep.subr.bf16.mxu0 0
        %1087 = vmatpush1.bf16.xpose.msra.mxu0 0
        %1088 = vmatprep.subr.bf16.mxu0 0
        %1089 = vmatpush1.bf16.xpose.msra.mxu0 0
        %1090 = vmatprep.subr.bf16.mxu0 0
        %1091 = vmatpush1.bf16.xpose.msra.mxu0 0
        %1092 = vmatprep.subr.bf16.mxu0 0
        %1093 = vmatpush1.bf16.xpose.msra.mxu0 0
        %1094 = vmatprep.subr.bf16.mxu0 0
        %1095 = vmatpush1.bf16.xpose.msra.mxu0 0
        %1096 = vmatprep.mubr.bf16.mxu0 0
        %1097 = vmatmul.mubr.bf16.gmra.mrb[0].mxu0 %v880
        %v1098 = vpop.f32.mrb[0].mxu0
        %v1099 = vadd.f32 %v761, %v1098
        %v1100 = vpop.f32.mrb[0].mxu0
        %v1101 = vpop.f32.mrb[0].mxu0
        %v1102 = vadd.f32 %v766, %v1101
        %v1103 = vpop.f32.mrb[0].mxu0
        %1104 = vmatprep.mubr.bf16.mxu0 0
        %1105 = vmatmul.mubr.bf16.gmra.mrb[0].mxu0 %v883
        %v1106 = vpop.f32.mrb[0].mxu0
        %v1107 = vadd.f32 %v771, %v1106
        %v1108 = vpop.f32.mrb[0].mxu0
        %v1109 = vpop.f32.mrb[0].mxu0
        %v1110 = vadd.f32 %v776, %v1109
        %v1111 = vpop.f32.mrb[0].mxu0
        %1112 = vmatprep.mubr.bf16.mxu0 0
        %1113 = vmatmul.mubr.bf16.gmra.mrb[0].mxu0 %v886
        %v1114 = vpop.f32.mrb[0].mxu0
        %v1115 = vadd.f32 %v781, %v1114
        %v1116 = vpop.f32.mrb[0].mxu0
        %v1117 = vpop.f32.mrb[0].mxu0
        %v1118 = vadd.f32 %v786, %v1117
        %v1119 = vpop.f32.mrb[0].mxu0
        %1120 = vmatprep.mubr.bf16.mxu0 0
        %1121 = vmatmul.mubr.bf16.gmra.mrb[0].mxu0 %v889
        %v1122 = vpop.f32.mrb[0].mxu0
        %v1123 = vadd.f32 %v791, %v1122
        %v1124 = vpop.f32.mrb[0].mxu0
        %v1125 = vpop.f32.mrb[0].mxu0
        %v1126 = vadd.f32 %v796, %v1125
        %v1127 = vpop.f32.mrb[0].mxu0
        %1128 = vmatprep.mubr.bf16.mxu0 0
        %1129 = vmatmul.mubr.bf16.gmra.mrb[0].mxu0 %v892
        %v1130 = vpop.f32.mrb[0].mxu0
        %v1131 = vadd.f32 %v801, %v1130
        %v1132 = vpop.f32.mrb[0].mxu0
        %v1133 = vpop.f32.mrb[0].mxu0
        %v1134 = vadd.f32 %v806, %v1133
        %v1135 = vpop.f32.mrb[0].mxu0
        %1136 = vmatprep.mubr.bf16.mxu0 0
        %1137 = vmatmul.mubr.bf16.gmra.mrb[0].mxu0 %v895
        %v1138 = vpop.f32.mrb[0].mxu0
        %v1139 = vadd.f32 %v811, %v1138
        %v1140 = vpop.f32.mrb[0].mxu0
        %v1141 = vpop.f32.mrb[0].mxu0
        %v1142 = vadd.f32 %v816, %v1141
        %v1143 = vpop.f32.mrb[0].mxu0
        %1144 = vmatprep.mubr.bf16.mxu0 0
        %1145 = vmatmul.mubr.bf16.gmra.mrb[0].mxu0 %v898
        %v1146 = vpop.f32.mrb[0].mxu0
        %v1147 = vadd.f32 %v821, %v1146
        %v1148 = vpop.f32.mrb[0].mxu0
        %v1149 = vpop.f32.mrb[0].mxu0
        %v1150 = vadd.f32 %v826, %v1149
        %v1151 = vpop.f32.mrb[0].mxu0
        %1152 = vmatprep.mubr.bf16.mxu0 0
        %1153 = vmatmul.mubr.bf16.gmra.mrb[0].mxu0 %v901
        %v1154 = vpop.f32.mrb[0].mxu0
        %v1155 = vadd.f32 %v831, %v1154
        %v1156 = vpop.f32.mrb[0].mxu0
        %v1157 = vpop.f32.mrb[0].mxu0
        %v1158 = vadd.f32 %v836, %v1157
        %v1159 = vpop.f32.mrb[0].mxu0
        %1160 = vdwg.mxu0
        %v1161 = vpack.c.bf16 %v990, %v986
        %v1162 = vpack.c.bf16 %v992, %v988
        %v1163 = vpack.c.bf16 %v1102, %v1099
        %v1164 = vpack.c.bf16 %v1000, %v996
        %v1165 = vpack.c.bf16 %v1002, %v998
        %v1166 = vpack.c.bf16 %v1110, %v1107
        %v1167 = vpack.c.bf16 %v1010, %v1006
        %v1168 = vpack.c.bf16 %v1012, %v1008
        %v1169 = vpack.c.bf16 %v1118, %v1115
        %v1170 = vpack.c.bf16 %v1020, %v1016
        %v1171 = vpack.c.bf16 %v1022, %v1018
        %v1172 = vpack.c.bf16 %v1126, %v1123
        %v1173 = vpack.c.bf16 %v1030, %v1026
        %v1174 = vpack.c.bf16 %v1032, %v1028
        %v1175 = vpack.c.bf16 %v1134, %v1131
        %v1176 = vpack.c.bf16 %v1040, %v1036
        %v1177 = vpack.c.bf16 %v1042, %v1038
        %v1178 = vpack.c.bf16 %v1142, %v1139
        %v1179 = vpack.c.bf16 %v1050, %v1046
        %v1180 = vpack.c.bf16 %v1052, %v1048
        %v1181 = vpack.c.bf16 %v1150, %v1147
        %v1182 = vpack.c.bf16 %v1060, %v1056
        %v1183 = vpack.c.bf16 %v1062, %v1058
        %v1184 = vpack.c.bf16 %v1158, %v1155
        %v1185 = vunpack.c.l.bf16 %v1161
        %v1186 = vunpack.c.l.bf16 %v1162
        %v1187 = vunpack.c.l.bf16 %v1163
        %v1188 = vunpack.c.h.bf16 %v1161
        %v1189 = vunpack.c.h.bf16 %v1162
        %v1190 = vunpack.c.h.bf16 %v1163
        %v1191 = vunpack.c.l.bf16 %v1164
        %v1192 = vunpack.c.l.bf16 %v1165
        %v1193 = vunpack.c.l.bf16 %v1166
        %v1194 = vunpack.c.h.bf16 %v1164
        %v1195 = vunpack.c.h.bf16 %v1165
        %v1196 = vunpack.c.h.bf16 %v1166
        %v1197 = vunpack.c.l.bf16 %v1167
        %v1198 = vunpack.c.l.bf16 %v1168
        %v1199 = vunpack.c.l.bf16 %v1169
        %v1200 = vunpack.c.h.bf16 %v1167
        %v1201 = vunpack.c.h.bf16 %v1168
        %v1202 = vunpack.c.h.bf16 %v1169
        %v1203 = vunpack.c.l.bf16 %v1170
        %v1204 = vunpack.c.l.bf16 %v1171
        %v1205 = vunpack.c.l.bf16 %v1172
        %v1206 = vunpack.c.h.bf16 %v1170
        %v1207 = vunpack.c.h.bf16 %v1171
        %v1208 = vunpack.c.h.bf16 %v1172
        %v1209 = vunpack.c.l.bf16 %v1173
        %v1210 = vunpack.c.l.bf16 %v1174
        %v1211 = vunpack.c.l.bf16 %v1175
        %v1212 = vunpack.c.h.bf16 %v1173
        %v1213 = vunpack.c.h.bf16 %v1174
        %v1214 = vunpack.c.h.bf16 %v1175
        %v1215 = vunpack.c.l.bf16 %v1176
        %v1216 = vunpack.c.l.bf16 %v1177
        %v1217 = vunpack.c.l.bf16 %v1178
        %v1218 = vunpack.c.h.bf16 %v1176
        %v1219 = vunpack.c.h.bf16 %v1177
        %v1220 = vunpack.c.h.bf16 %v1178
        %v1221 = vunpack.c.l.bf16 %v1179
        %v1222 = vunpack.c.l.bf16 %v1180
        %v1223 = vunpack.c.l.bf16 %v1181
        %v1224 = vunpack.c.h.bf16 %v1179
        %v1225 = vunpack.c.h.bf16 %v1180
        %v1226 = vunpack.c.h.bf16 %v1181
        %v1227 = vunpack.c.l.bf16 %v1182
        %v1228 = vunpack.c.l.bf16 %v1183
        %v1229 = vunpack.c.l.bf16 %v1184
        %v1230 = vunpack.c.h.bf16 %v1182
        %v1231 = vunpack.c.h.bf16 %v1183
        %v1232 = vunpack.c.h.bf16 %v1184
        %v1233 = vsub.f32 %v1185, %v761
        %v1234 = vsub.f32 %v1186, %v761
        %v1235 = vsub.f32 %v1187, %v761
        %v1236 = vsub.f32 %v1188, %v766
        %v1237 = vsub.f32 %v1189, %v766
        %v1238 = vsub.f32 %v1190, %v766
        %v1239 = vsub.f32 %v1191, %v771
        %v1240 = vsub.f32 %v1192, %v771
        %v1241 = vsub.f32 %v1193, %v771
        %v1242 = vsub.f32 %v1194, %v776
        %v1243 = vsub.f32 %v1195, %v776
        %v1244 = vsub.f32 %v1196, %v776
        %v1245 = vsub.f32 %v1197, %v781
        %v1246 = vsub.f32 %v1198, %v781
        %v1247 = vsub.f32 %v1199, %v781
        %v1248 = vsub.f32 %v1200, %v786
        %v1249 = vsub.f32 %v1201, %v786
        %v1250 = vsub.f32 %v1202, %v786
        %v1251 = vsub.f32 %v1203, %v791
        %v1252 = vsub.f32 %v1204, %v791
        %v1253 = vsub.f32 %v1205, %v791
        %v1254 = vsub.f32 %v1206, %v796
        %v1255 = vsub.f32 %v1207, %v796
        %v1256 = vsub.f32 %v1208, %v796
        %v1257 = vsub.f32 %v1209, %v801
        %v1258 = vsub.f32 %v1210, %v801
        %v1259 = vsub.f32 %v1211, %v801
        %v1260 = vsub.f32 %v1212, %v806
        %v1261 = vsub.f32 %v1213, %v806
        %v1262 = vsub.f32 %v1214, %v806
        %v1263 = vsub.f32 %v1215, %v811
        %v1264 = vsub.f32 %v1216, %v811
        %v1265 = vsub.f32 %v1217, %v811
        %v1266 = vsub.f32 %v1218, %v816
        %v1267 = vsub.f32 %v1219, %v816
        %v1268 = vsub.f32 %v1220, %v816
        %v1269 = vsub.f32 %v1221, %v821
        %v1270 = vsub.f32 %v1222, %v821
        %v1271 = vsub.f32 %v1223, %v821
        %v1272 = vsub.f32 %v1224, %v826
        %v1273 = vsub.f32 %v1225, %v826
        %v1274 = vsub.f32 %v1226, %v826
        %v1275 = vsub.f32 %v1227, %v831
        %v1276 = vsub.f32 %v1228, %v831
        %v1277 = vsub.f32 %v1229, %v831
        %v1278 = vsub.f32 %v1230, %v836
        %v1279 = vsub.f32 %v1231, %v836
        %v1280 = vsub.f32 %v1232, %v836
        %v1281 = vld [vmem:[%s282] sm:$0x7]
        %v1283 = vlaneseq
        %v1284 = vshrl.u32 %v1283, 7
        %v1285 = vsub.s32 0, %v1284
        %v1286 = vrot.slane %v1281, %v1285
        %v1287 = vlaneseq
        %v1288 = vshrl.u32 %v1287, 7
        %v1289 = vsub.s32 1, %v1288
        %v1290 = vrot.slane %v1281, %v1289
        %v1291 = vlaneseq
        %v1292 = vshrl.u32 %v1291, 7
        %v1293 = vsub.s32 2, %v1292
        %v1294 = vrot.slane %v1281, %v1293
        %v1298 = vmul.f32 %v1233, %v1286
        %v1299 = vmul.f32 %v1234, %v1290
        %v1300 = vmul.f32 %v1235, %v1294
        %v1301 = vmul.f32 %v1236, %v1286
        %v1302 = vmul.f32 %v1237, %v1290
        %v1303 = vmul.f32 %v1238, %v1294
        %v1304 = vmul.f32 %v1239, %v1286
        %v1305 = vmul.f32 %v1240, %v1290
        %v1306 = vmul.f32 %v1241, %v1294
        %v1307 = vmul.f32 %v1242, %v1286
        %v1308 = vmul.f32 %v1243, %v1290
        %v1309 = vmul.f32 %v1244, %v1294
        %v1310 = vmul.f32 %v1245, %v1286
        %v1311 = vmul.f32 %v1246, %v1290
        %v1312 = vmul.f32 %v1247, %v1294
        %v1313 = vmul.f32 %v1248, %v1286
        %v1314 = vmul.f32 %v1249, %v1290
        %v1315 = vmul.f32 %v1250, %v1294
        %v1316 = vmul.f32 %v1251, %v1286
        %v1317 = vmul.f32 %v1252, %v1290
        %v1318 = vmul.f32 %v1253, %v1294
        %v1319 = vmul.f32 %v1254, %v1286
        %v1320 = vmul.f32 %v1255, %v1290
        %v1321 = vmul.f32 %v1256, %v1294
        %v1322 = vmul.f32 %v1257, %v1286
        %v1323 = vmul.f32 %v1258, %v1290
        %v1324 = vmul.f32 %v1259, %v1294
        %v1325 = vmul.f32 %v1260, %v1286
        %v1326 = vmul.f32 %v1261, %v1290
        %v1327 = vmul.f32 %v1262, %v1294
        %v1328 = vmul.f32 %v1263, %v1286
        %v1329 = vmul.f32 %v1264, %v1290
        %v1330 = vmul.f32 %v1265, %v1294
        %v1331 = vmul.f32 %v1266, %v1286
        %v1332 = vmul.f32 %v1267, %v1290
        %v1333 = vmul.f32 %v1268, %v1294
        %v1334 = vmul.f32 %v1269, %v1286
        %v1335 = vmul.f32 %v1270, %v1290
        %v1336 = vmul.f32 %v1271, %v1294
        %v1337 = vmul.f32 %v1272, %v1286
        %v1338 = vmul.f32 %v1273, %v1290
        %v1339 = vmul.f32 %v1274, %v1294
        %v1340 = vmul.f32 %v1275, %v1286
        %v1341 = vmul.f32 %v1276, %v1290
        %v1342 = vmul.f32 %v1277, %v1294
        %v1343 = vmul.f32 %v1278, %v1286
        %v1344 = vmul.f32 %v1279, %v1290
        %v1345 = vmul.f32 %v1280, %v1294
        %v1346 = vadd.f32 %v1298, %v1299
        %v1347 = vadd.f32 %v1346, %v1300
        %1348 = vadd.xlane.f32.xlu0 %v1347
        %v1349 = vpop.xlane.xlu0 %1348
        %v1350 = vadd.f32 %v1301, %v1302
        %v1351 = vadd.f32 %v1350, %v1303
        %1352 = vadd.xlane.f32.xlu0 %v1351
        %v1353 = vpop.xlane.xlu0 %1352
        %v1354 = vadd.f32 %v1304, %v1305
        %v1355 = vadd.f32 %v1354, %v1306
        %1356 = vadd.xlane.f32.xlu0 %v1355
        %v1357 = vpop.xlane.xlu0 %1356
        %v1358 = vadd.f32 %v1307, %v1308
        %v1359 = vadd.f32 %v1358, %v1309
        %1360 = vadd.xlane.f32.xlu0 %v1359
        %v1361 = vpop.xlane.xlu0 %1360
        %v1362 = vadd.f32 %v1310, %v1311
        %v1363 = vadd.f32 %v1362, %v1312
        %1364 = vadd.xlane.f32.xlu0 %v1363
        %v1365 = vpop.xlane.xlu0 %1364
        %v1366 = vadd.f32 %v1313, %v1314
        %v1367 = vadd.f32 %v1366, %v1315
        %1368 = vadd.xlane.f32.xlu0 %v1367
        %v1369 = vpop.xlane.xlu0 %1368
        %v1370 = vadd.f32 %v1316, %v1317
        %v1371 = vadd.f32 %v1370, %v1318
        %1372 = vadd.xlane.f32.xlu0 %v1371
        %v1373 = vpop.xlane.xlu0 %1372
        %v1374 = vadd.f32 %v1319, %v1320
        %v1375 = vadd.f32 %v1374, %v1321
        %1376 = vadd.xlane.f32.xlu0 %v1375
        %v1377 = vpop.xlane.xlu0 %1376
        %v1378 = vadd.f32 %v1322, %v1323
        %v1379 = vadd.f32 %v1378, %v1324
        %1380 = vadd.xlane.f32.xlu0 %v1379
        %v1381 = vpop.xlane.xlu0 %1380
        %v1382 = vadd.f32 %v1325, %v1326
        %v1383 = vadd.f32 %v1382, %v1327
        %1384 = vadd.xlane.f32.xlu0 %v1383
        %v1385 = vpop.xlane.xlu0 %1384
        %v1386 = vadd.f32 %v1328, %v1329
        %v1387 = vadd.f32 %v1386, %v1330
        %1388 = vadd.xlane.f32.xlu0 %v1387
        %v1389 = vpop.xlane.xlu0 %1388
        %v1390 = vadd.f32 %v1331, %v1332
        %v1391 = vadd.f32 %v1390, %v1333
        %1392 = vadd.xlane.f32.xlu0 %v1391
        %v1393 = vpop.xlane.xlu0 %1392
        %v1394 = vadd.f32 %v1334, %v1335
        %v1395 = vadd.f32 %v1394, %v1336
        %1396 = vadd.xlane.f32.xlu0 %v1395
        %v1397 = vpop.xlane.xlu0 %1396
        %v1398 = vadd.f32 %v1337, %v1338
        %v1399 = vadd.f32 %v1398, %v1339
        %1400 = vadd.xlane.f32.xlu0 %v1399
        %v1401 = vpop.xlane.xlu0 %1400
        %v1402 = vadd.f32 %v1340, %v1341
        %v1403 = vadd.f32 %v1402, %v1342
        %1404 = vadd.xlane.f32.xlu0 %v1403
        %v1405 = vpop.xlane.xlu0 %1404
        %v1406 = vadd.f32 %v1343, %v1344
        %v1407 = vadd.f32 %v1406, %v1345
        %1408 = vadd.xlane.f32.xlu0 %v1407
        %v1409 = vpop.xlane.xlu0 %1408
        %v1410 = vmul.f32 %v1298, %v1298
        %v1411 = vmul.f32 %v1299, %v1299
        %v1412 = vmul.f32 %v1300, %v1300
        %v1413 = vmul.f32 %v1301, %v1301
        %v1414 = vmul.f32 %v1302, %v1302
        %v1415 = vmul.f32 %v1303, %v1303
        %v1416 = vmul.f32 %v1304, %v1304
        %v1417 = vmul.f32 %v1305, %v1305
        %v1418 = vmul.f32 %v1306, %v1306
        %v1419 = vmul.f32 %v1307, %v1307
        %v1420 = vmul.f32 %v1308, %v1308
        %v1421 = vmul.f32 %v1309, %v1309
        %v1422 = vmul.f32 %v1310, %v1310
        %v1423 = vmul.f32 %v1311, %v1311
        %v1424 = vmul.f32 %v1312, %v1312
        %v1425 = vmul.f32 %v1313, %v1313
        %v1426 = vmul.f32 %v1314, %v1314
        %v1427 = vmul.f32 %v1315, %v1315
        %v1428 = vmul.f32 %v1316, %v1316
        %v1429 = vmul.f32 %v1317, %v1317
        %v1430 = vmul.f32 %v1318, %v1318
        %v1431 = vmul.f32 %v1319, %v1319
        %v1432 = vmul.f32 %v1320, %v1320
        %v1433 = vmul.f32 %v1321, %v1321
        %v1434 = vmul.f32 %v1322, %v1322
        %v1435 = vmul.f32 %v1323, %v1323
        %v1436 = vmul.f32 %v1324, %v1324
        %v1437 = vmul.f32 %v1325, %v1325
        %v1438 = vmul.f32 %v1326, %v1326
        %v1439 = vmul.f32 %v1327, %v1327
        %v1440 = vmul.f32 %v1328, %v1328
        %v1441 = vmul.f32 %v1329, %v1329
        %v1442 = vmul.f32 %v1330, %v1330
        %v1443 = vmul.f32 %v1331, %v1331
        %v1444 = vmul.f32 %v1332, %v1332
        %v1445 = vmul.f32 %v1333, %v1333
        %v1446 = vmul.f32 %v1334, %v1334
        %v1447 = vmul.f32 %v1335, %v1335
        %v1448 = vmul.f32 %v1336, %v1336
        %v1449 = vmul.f32 %v1337, %v1337
        %v1450 = vmul.f32 %v1338, %v1338
        %v1451 = vmul.f32 %v1339, %v1339
        %v1452 = vmul.f32 %v1340, %v1340
        %v1453 = vmul.f32 %v1341, %v1341
        %v1454 = vmul.f32 %v1342, %v1342
        %v1455 = vmul.f32 %v1343, %v1343
        %v1456 = vmul.f32 %v1344, %v1344
        %v1457 = vmul.f32 %v1345, %v1345
        %v1458 = vadd.f32 %v1410, %v1411
        %v1459 = vadd.f32 %v1458, %v1412
        %1460 = vadd.xlane.f32.xlu0 %v1459
        %v1461 = vpop.xlane.xlu0 %1460
        %v1462 = vadd.f32 %v1413, %v1414
        %v1463 = vadd.f32 %v1462, %v1415
        %1464 = vadd.xlane.f32.xlu0 %v1463
        %v1465 = vpop.xlane.xlu0 %1464
        %v1466 = vadd.f32 %v1416, %v1417
        %v1467 = vadd.f32 %v1466, %v1418
        %1468 = vadd.xlane.f32.xlu0 %v1467
        %v1469 = vpop.xlane.xlu0 %1468
        %v1470 = vadd.f32 %v1419, %v1420
        %v1471 = vadd.f32 %v1470, %v1421
        %1472 = vadd.xlane.f32.xlu0 %v1471
        %v1473 = vpop.xlane.xlu0 %1472
        %v1474 = vadd.f32 %v1422, %v1423
        %v1475 = vadd.f32 %v1474, %v1424
        %1476 = vadd.xlane.f32.xlu0 %v1475
        %v1477 = vpop.xlane.xlu0 %1476
        %v1478 = vadd.f32 %v1425, %v1426
        %v1479 = vadd.f32 %v1478, %v1427
        %1480 = vadd.xlane.f32.xlu0 %v1479
        %v1481 = vpop.xlane.xlu0 %1480
        %v1482 = vadd.f32 %v1428, %v1429
        %v1483 = vadd.f32 %v1482, %v1430
        %1484 = vadd.xlane.f32.xlu0 %v1483
        %v1485 = vpop.xlane.xlu0 %1484
        %v1486 = vadd.f32 %v1431, %v1432
        %v1487 = vadd.f32 %v1486, %v1433
        %1488 = vadd.xlane.f32.xlu0 %v1487
        %v1489 = vpop.xlane.xlu0 %1488
        %v1490 = vadd.f32 %v1434, %v1435
        %v1491 = vadd.f32 %v1490, %v1436
        %1492 = vadd.xlane.f32.xlu0 %v1491
        %v1493 = vpop.xlane.xlu0 %1492
        %v1494 = vadd.f32 %v1437, %v1438
        %v1495 = vadd.f32 %v1494, %v1439
        %1496 = vadd.xlane.f32.xlu0 %v1495
        %v1497 = vpop.xlane.xlu0 %1496
        %v1498 = vadd.f32 %v1440, %v1441
        %v1499 = vadd.f32 %v1498, %v1442
        %1500 = vadd.xlane.f32.xlu0 %v1499
        %v1501 = vpop.xlane.xlu0 %1500
        %v1502 = vadd.f32 %v1443, %v1444
        %v1503 = vadd.f32 %v1502, %v1445
        %1504 = vadd.xlane.f32.xlu0 %v1503
        %v1505 = vpop.xlane.xlu0 %1504
        %v1506 = vadd.f32 %v1446, %v1447
        %v1507 = vadd.f32 %v1506, %v1448
        %1508 = vadd.xlane.f32.xlu0 %v1507
        %v1509 = vpop.xlane.xlu0 %1508
        %v1510 = vadd.f32 %v1449, %v1450
        %v1511 = vadd.f32 %v1510, %v1451
        %1512 = vadd.xlane.f32.xlu0 %v1511
        %v1513 = vpop.xlane.xlu0 %1512
        %v1514 = vadd.f32 %v1452, %v1453
        %v1515 = vadd.f32 %v1514, %v1454
        %1516 = vadd.xlane.f32.xlu0 %v1515
        %v1517 = vpop.xlane.xlu0 %1516
        %v1518 = vadd.f32 %v1455, %v1456
        %v1519 = vadd.f32 %v1518, %v1457
        %1520 = vadd.xlane.f32.xlu0 %v1519
        %v1521 = vpop.xlane.xlu0 %1520
        %vm1522 = vcmask 7168
        %v1523 = vsel %vm1522, %v1349, %v1461
        %v1524 = vsel %vm1522, %v1353, %v1465
        %v1525 = vsel %vm1522, %v1357, %v1469
        %v1526 = vsel %vm1522, %v1361, %v1473
        %v1527 = vsel %vm1522, %v1365, %v1477
        %v1528 = vsel %vm1522, %v1369, %v1481
        %v1529 = vsel %vm1522, %v1373, %v1485
        %v1530 = vsel %vm1522, %v1377, %v1489
        %v1531 = vsel %vm1522, %v1381, %v1493
        %v1532 = vsel %vm1522, %v1385, %v1497
        %v1533 = vsel %vm1522, %v1389, %v1501
        %v1534 = vsel %vm1522, %v1393, %v1505
        %v1535 = vsel %vm1522, %v1397, %v1509
        %v1536 = vsel %vm1522, %v1401, %v1513
        %v1537 = vsel %vm1522, %v1405, %v1517
        %v1538 = vsel %vm1522, %v1409, %v1521
        %vm1539 = vcmask 15360
        %v1540 = vsel %vm1539, %v1523, 0.0
        %v1541 = vsel %vm1539, %v1524, 0.0
        %v1542 = vsel %vm1539, %v1525, 0.0
        %v1543 = vsel %vm1539, %v1526, 0.0
        %v1544 = vsel %vm1539, %v1527, 0.0
        %v1545 = vsel %vm1539, %v1528, 0.0
        %v1546 = vsel %vm1539, %v1529, 0.0
        %v1547 = vsel %vm1539, %v1530, 0.0
        %v1548 = vsel %vm1539, %v1531, 0.0
        %v1549 = vsel %vm1539, %v1532, 0.0
        %v1550 = vsel %vm1539, %v1533, 0.0
        %v1551 = vsel %vm1539, %v1534, 0.0
        %v1552 = vsel %vm1539, %v1535, 0.0
        %v1553 = vsel %vm1539, %v1536, 0.0
        %v1554 = vsel %vm1539, %v1537, 0.0
        %v1555 = vsel %vm1539, %v1538, 0.0
        %vm1556 = vcmask 64512
        %1557 = vst.msk [vmem:[%s293] sm:$0xff] %vm1556, %v1540
        %1558 = vst.msk [vmem:[%s293 + $0x8] sm:$0xff] %vm1556, %v1541
        %1559 = vst.msk [vmem:[%s293 + $0x10] sm:$0xff] %vm1556, %v1542
        %1560 = vst.msk [vmem:[%s293 + $0x18] sm:$0xff] %vm1556, %v1543
        %1561 = vst.msk [vmem:[%s293 + $0x20] sm:$0xff] %vm1556, %v1544
        %1562 = vst.msk [vmem:[%s293 + $0x28] sm:$0xff] %vm1556, %v1545
        %1563 = vst.msk [vmem:[%s293 + $0x30] sm:$0xff] %vm1556, %v1546
        %1564 = vst.msk [vmem:[%s293 + $0x38] sm:$0xff] %vm1556, %v1547
        %1565 = vst.msk [vmem:[%s293 + $0x40] sm:$0xff] %vm1556, %v1548
        %1566 = vst.msk [vmem:[%s293 + $0x48] sm:$0xff] %vm1556, %v1549
        %1567 = vst.msk [vmem:[%s293 + $0x50] sm:$0xff] %vm1556, %v1550
        %1568 = vst.msk [vmem:[%s293 + $0x58] sm:$0xff] %vm1556, %v1551
        %1569 = vst.msk [vmem:[%s293 + $0x60] sm:$0xff] %vm1556, %v1552
        %1570 = vst.msk [vmem:[%s293 + $0x68] sm:$0xff] %vm1556, %v1553
        %1571 = vst.msk [vmem:[%s293 + $0x70] sm:$0xff] %vm1556, %v1554
        %1572 = vst.msk [vmem:[%s293 + $0x78] sm:$0xff] %vm1556, %v1555
        %v1597 = vunpack.c.l.b16 %v1161
        %v1598 = vunpack.c.l.b16 %v1162
        %v1599 = vunpack.c.l.b16 %v1163
        %v1600 = vunpack.c.h.b16 %v1161
        %v1601 = vunpack.c.h.b16 %v1162
        %v1602 = vunpack.c.h.b16 %v1163
        %v1603 = vunpack.c.l.b16 %v1164
        %v1604 = vunpack.c.l.b16 %v1165
        %v1605 = vunpack.c.l.b16 %v1166
        %v1606 = vunpack.c.h.b16 %v1164
        %v1607 = vunpack.c.h.b16 %v1165
        %v1608 = vunpack.c.h.b16 %v1166
        %v1609 = vunpack.c.l.b16 %v1167
        %v1610 = vunpack.c.l.b16 %v1168
        %v1611 = vunpack.c.l.b16 %v1169
        %v1612 = vunpack.c.h.b16 %v1167
        %v1613 = vunpack.c.h.b16 %v1168
        %v1614 = vunpack.c.h.b16 %v1169
        %v1615 = vunpack.c.l.b16 %v1170
        %v1616 = vunpack.c.l.b16 %v1171
        %v1617 = vunpack.c.l.b16 %v1172
        %v1618 = vunpack.c.h.b16 %v1170
        %v1619 = vunpack.c.h.b16 %v1171
        %v1620 = vunpack.c.h.b16 %v1172
        %v1621 = vunpack.c.l.b16 %v1173
        %v1622 = vunpack.c.l.b16 %v1174
        %v1623 = vunpack.c.l.b16 %v1175
        %v1624 = vunpack.c.h.b16 %v1173
        %v1625 = vunpack.c.h.b16 %v1174
        %v1626 = vunpack.c.h.b16 %v1175
        %v1627 = vunpack.c.l.b16 %v1176
        %v1628 = vunpack.c.l.b16 %v1177
        %v1629 = vunpack.c.l.b16 %v1178
        %v1630 = vunpack.c.h.b16 %v1176
        %v1631 = vunpack.c.h.b16 %v1177
        %v1632 = vunpack.c.h.b16 %v1178
        %v1633 = vunpack.c.l.b16 %v1179
        %v1634 = vunpack.c.l.b16 %v1180
        %v1635 = vunpack.c.l.b16 %v1181
        %v1636 = vunpack.c.h.b16 %v1179
        %v1637 = vunpack.c.h.b16 %v1180
        %v1638 = vunpack.c.h.b16 %v1181
        %v1639 = vunpack.c.l.b16 %v1182
        %v1640 = vunpack.c.l.b16 %v1183
        %v1641 = vunpack.c.l.b16 %v1184
        %v1642 = vunpack.c.h.b16 %v1182
        %v1643 = vunpack.c.h.b16 %v1183
        %v1644 = vunpack.c.h.b16 %v1184
        %v1645 = vpack.c.b16 %v1598, %v1597
        %v1646 = vpack.c.b16 %v1599, %v1599
        %v1647 = vpack.c.b16 %v1601, %v1600
        %v1648 = vpack.c.b16 %v1602, %v1602
        %v1649 = vpack.c.b16 %v1604, %v1603
        %v1650 = vpack.c.b16 %v1605, %v1605
        %v1651 = vpack.c.b16 %v1607, %v1606
        %v1652 = vpack.c.b16 %v1608, %v1608
        %v1653 = vpack.c.b16 %v1610, %v1609
        %v1654 = vpack.c.b16 %v1611, %v1611
        %v1655 = vpack.c.b16 %v1613, %v1612
        %v1656 = vpack.c.b16 %v1614, %v1614
        %v1657 = vpack.c.b16 %v1616, %v1615
        %v1658 = vpack.c.b16 %v1617, %v1617
        %v1659 = vpack.c.b16 %v1619, %v1618
        %v1660 = vpack.c.b16 %v1620, %v1620
        %v1661 = vpack.c.b16 %v1622, %v1621
        %v1662 = vpack.c.b16 %v1623, %v1623
        %v1663 = vpack.c.b16 %v1625, %v1624
        %v1664 = vpack.c.b16 %v1626, %v1626
        %v1665 = vpack.c.b16 %v1628, %v1627
        %v1666 = vpack.c.b16 %v1629, %v1629
        %v1667 = vpack.c.b16 %v1631, %v1630
        %v1668 = vpack.c.b16 %v1632, %v1632
        %v1669 = vpack.c.b16 %v1634, %v1633
        %v1670 = vpack.c.b16 %v1635, %v1635
        %v1671 = vpack.c.b16 %v1637, %v1636
        %v1672 = vpack.c.b16 %v1638, %v1638
        %v1673 = vpack.c.b16 %v1640, %v1639
        %v1674 = vpack.c.b16 %v1641, %v1641
        %v1675 = vpack.c.b16 %v1643, %v1642
        %v1676 = vpack.c.b16 %v1644, %v1644
        %1709 = vst [vmem:[%s258] sm:$0xff] %v1645
        %1710 = vst [vmem:[%s258 + $0x8] sm:$0xf] %v1646
        %1711 = vst [vmem:[%s258 + $0xc] sm:$0xff] %v1647
        %1712 = vst [vmem:[%s258 + $0x14] sm:$0xf] %v1648
        %1713 = vst [vmem:[%s258 + $0x18] sm:$0xff] %v1649
        %1714 = vst [vmem:[%s258 + $0x20] sm:$0xf] %v1650
        %1715 = vst [vmem:[%s258 + $0x24] sm:$0xff] %v1651
        %1716 = vst [vmem:[%s258 + $0x2c] sm:$0xf] %v1652
        %1717 = vst [vmem:[%s258 + $0x30] sm:$0xff] %v1653
        %1718 = vst [vmem:[%s258 + $0x38] sm:$0xf] %v1654
        %1719 = vst [vmem:[%s258 + $0x3c] sm:$0xff] %v1655
        %1720 = vst [vmem:[%s258 + $0x44] sm:$0xf] %v1656
        %1721 = vst [vmem:[%s258 + $0x48] sm:$0xff] %v1657
        %1722 = vst [vmem:[%s258 + $0x50] sm:$0xf] %v1658
        %1723 = vst [vmem:[%s258 + $0x54] sm:$0xff] %v1659
        %1724 = vst [vmem:[%s258 + $0x5c] sm:$0xf] %v1660
        %1725 = vst [vmem:[%s258 + $0x60] sm:$0xff] %v1661
        %1726 = vst [vmem:[%s258 + $0x68] sm:$0xf] %v1662
        %1727 = vst [vmem:[%s258 + $0x6c] sm:$0xff] %v1663
        %1728 = vst [vmem:[%s258 + $0x74] sm:$0xf] %v1664
        %1729 = vst [vmem:[%s258 + $0x78] sm:$0xff] %v1665
        %1730 = vst [vmem:[%s258 + $0x80] sm:$0xf] %v1666
        %1731 = vst [vmem:[%s258 + $0x84] sm:$0xff] %v1667
        %1732 = vst [vmem:[%s258 + $0x8c] sm:$0xf] %v1668
        %1733 = vst [vmem:[%s258 + $0x90] sm:$0xff] %v1669
        %1734 = vst [vmem:[%s258 + $0x98] sm:$0xf] %v1670
        %1735 = vst [vmem:[%s258 + $0x9c] sm:$0xff] %v1671
        %1736 = vst [vmem:[%s258 + $0xa4] sm:$0xf] %v1672
        %1737 = vst [vmem:[%s258 + $0xa8] sm:$0xff] %v1673
        %1738 = vst [vmem:[%s258 + $0xb0] sm:$0xf] %v1674
        %1739 = vst [vmem:[%s258 + $0xb4] sm:$0xff] %v1675
        %1740 = vst [vmem:[%s258 + $0xbc] sm:$0xf] %v1676
        %s1741 = sand.u32 %s138, 1
        %s1742 = scalar_lea.sflag [#allocation3], %s1741
        %s1743 = sand.u32 %s138, 1
        %s1744 = smul.addr %s1743, 192
        %s1745 = scalar_lea.vmem [#allocation2], %s1744
        %p1746 = scmp.lt.s32.totalorder %s24, 1
        %s1747 = scalar_select %p1746, %s24, 1
        %p1748 = scmp.lt.s32.totalorder %s25, 0
        %s1749 = scalar_select %p1748, %s25, 0
        %s1750 = smul.addr %s1749, 16
        %s1751 = smul.addr %s1747, 16
        %s1752 = sadd.s32 %s1750, %s1751
        %s1753 = smul.addr %s1752, 8
        %s1754 = scalar_lea.vmem %s5, %s1753
        // Predicated region
        $region37: #{tpu_custom_call.1} parent=35 // pred_check
          %p1755 = pneg %p148
        $region38: #{tpu_custom_call.1} parent=35 // pred_check_branch
          %1757 = sbr.rel (%p1755) target = $region40
        $region39: #{tpu_custom_call.1} parent=35 // pred_region
          %s1758 = smul.u32 3, %s25
          %s1760 = ssub.s32 3072, 3072
          %1761 = vsyncadd %s1742, %s1760
          %s1762 = smul.addr %s24, 48
          %s1763 = sadd.s32 %s1758, %s1762
          %s1764 = smul.addr %s1763, 64
          %s1765 = scalar_lea.hbm %s4, %s1764
          %s1766 = sshll.u32 %s1745, 4
          %s1767 = int_to_ptr.vmem [resolvable:$true] %s1766
          %1772 = dma.vmem_to_hbm [thread:$0]  %s1767, 3072, %s1765, %s1742, 192, 192, 12
        $region40: #{tpu_custom_call.1} parent=35 // pred_fallthru
          _
        // Predicated region
        $region41: #{tpu_custom_call.1} parent=35 // pred_check
          %p1773 = pneg %p176
        $region42: #{tpu_custom_call.1} parent=35 // pred_check_branch
          %1775 = sbr.rel (%p1773) target = $region44
        $region43: #{tpu_custom_call.1} parent=35 // pred_region
          _
        $region44: #{tpu_custom_call.1} parent=35 // pred_fallthru
          _
      $region36: #{tpu_custom_call.1} parent=5 // pred_fallthru
        _
      %p1776 = scmp.le.s32.totalorder 2, %s15
      // Predicated region
      $region45: #{tpu_custom_call.1} parent=5 // pred_check
        %p1777 = pneg %p1776
      $region46: #{tpu_custom_call.1} parent=5 // pred_check_branch
        %1779 = sbr.rel (%p1777) target = $region48
      $region47: #{tpu_custom_call.1} parent=5 // pred_region
        %s1780 = ssub.s32 %s15, 2
        // Predicated region
        $region49: #{tpu_custom_call.1} parent=47 // pred_check
          %p1781 = pneg %p154
        $region50: #{tpu_custom_call.1} parent=47 // pred_check_branch
          %1783 = sbr.rel (%p1781) target = $region52
        $region51: #{tpu_custom_call.1} parent=47 // pred_region
          %s1784 = sand.u32 %s139, 1
          %s1785 = scalar_lea.sflag [#allocation3], %s1784
          %s1786 = sand.u32 %s139, 1
          %s1787 = smul.addr %s1786, 192
          %s1788 = scalar_lea.vmem [#allocation2], %s1787
          %1789 = dma.done %s1785, 3072
        $region52: #{tpu_custom_call.1} parent=47 // pred_fallthru
          _
        // Predicated region
        $region53: #{tpu_custom_call.1} parent=47 // pred_check
          %p1790 = pneg %p182
        $region54: #{tpu_custom_call.1} parent=47 // pred_check_branch
          %1792 = sbr.rel (%p1790) target = $region56
        $region55: #{tpu_custom_call.1} parent=47 // pred_region
          %p1793 = scmp.lt.s32.totalorder %s26, 1
          %s1794 = scalar_select %p1793, %s26, 1
          %p1795 = scmp.lt.s32.totalorder %s27, 0
          %s1796 = scalar_select %p1795, %s27, 0
          %s1797 = smul.addr %s1796, 16
          %s1798 = smul.addr %s1794, 16
          %s1799 = sadd.s32 %s1797, %s1798
          %s1800 = smul.addr %s1799, 8
          %s1801 = scalar_lea.vmem %s5, %s1800
        $region56: #{tpu_custom_call.1} parent=47 // pred_fallthru
          _
      $region48: #{tpu_custom_call.1} parent=5 // pred_fallthru
        _
    $region6: #{tpu_custom_call.1} parent=1 // loop_footer
      %s19 = sadd.s32 1, %s15
    $region7: #{tpu_custom_call.1} parent=1 // loop_footer_branch
      %14 = sbr.rel target = $region3
    $region8: #{tpu_custom_call.1} parent=1 // loop_exit
      _
    %1802 = vsyncpa [#allocation3], 1
    %s1803 = scalar_lea.sflag [#allocation3], 1
    %1804 = vsyncpa %s1803, 1

</llo_original>
